<compile_context>
chip_gen: v6e
topology: v6e:2x2x1
jax: 0.10.0
libtpu: 0.0.40
codegen_flags: <defaults>
</compile_context>

<pallas_src>
import functools

import jax
import jax.numpy as jnp
from jax.experimental import pallas as pl
from jax.experimental.pallas import tpu as pltpu

N_PATCHES = 196      # fixed by nn.Parameter(torch.randn(1, 196, patch_dim))
PATCH_DIM = 32       # DIMENSION (small synthetic choice)
LN_EPS = 1e-5
_VEC_LANES = 128     # packed small-parameter tile is (D, 128)
_MAX_BLOCK_B = 32    # batch items per grid step (196*32 lanes = 49 full vregs)
_HP = jax.lax.Precision.HIGHEST


def _layernorm(x, gamma, beta, axis):
    mu = jnp.mean(x, axis=axis, keepdims=True)
    var = jnp.mean(jnp.square(x - mu), axis=axis, keepdims=True)
    return (x - mu) * jax.lax.rsqrt(var + LN_EPS) * gamma + beta


def _importance_kernel(x_ref, posb_ref, w1t_ref, w2t_ref, w3t_ref, vec_ref,
                       o_ref, *, d):
    """One grid step: score block_b batch items in a transposed layout.

    x_ref   : (1, D, L)   X^T tile, L = block_b * N (batch items on lanes)
    posb_ref: (D, L)      first-layer bias with pos folded in, pre-tiled
    w1t/w2t/w3t: (D, D), (D/2, D), (D/4, D/2)   pre-transposed weights
    vec_ref : (D, 128)    columns: g1, be1, b2, g2, be2, b3, g3, be3, w4, b4
    o_ref   : (1, 1, L)   lane-dense score row
    """
    d2, d4 = d // 2, d // 4

    xT = x_ref[0]                             # (D, L)
    vp = vec_ref[...]                         # (D, 128)
    g1c, be1c = vp[:d, 0:1], vp[:d, 1:2]
    b2c, g2c, be2c = vp[:d2, 2:3], vp[:d2, 3:4], vp[:d2, 4:5]
    b3c, g3c, be3c = vp[:d4, 5:6], vp[:d4, 6:7], vp[:d4, 7:8]
    w4c = vp[:d4, 8:9]                        # (D/4, 1)
    b4s = vp[0:1, 9:10]                       # (1, 1)

    # Layer 1: h^T = W1^T @ X^T + (pos@W1 + b1)^T  (bias pre-tiled over items)
    h = jnp.dot(w1t_ref[...], xT,
                preferred_element_type=jnp.float32, precision=_HP)
    h = h + posb_ref[...]
    h = jax.nn.gelu(_layernorm(h, g1c, be1c, axis=0), approximate=True)

    # Layer 2: (D -> D/2)
    h = jnp.dot(w2t_ref[...], h,
                preferred_element_type=jnp.float32, precision=_HP) + b2c
    h = jax.nn.gelu(_layernorm(h, g2c, be2c, axis=0), approximate=True)

    # Layer 3: (D/2 -> D/4)
    h = jnp.dot(w3t_ref[...], h,
                preferred_element_type=jnp.float32, precision=_HP) + b3c
    h = jax.nn.gelu(_layernorm(h, g3c, be3c, axis=0), approximate=True)

    # Final Linear(D/4, 1): sublane multiply-reduce -> lane-dense (1, L) row.
    s = jnp.sum(h * w4c, axis=0, keepdims=True) + b4s      # (1, L)
    o_ref[0] = jax.nn.sigmoid(s)


def _pick_block_b(batch):
    """Largest divisor of `batch` <= _MAX_BLOCK_B that keeps >= 2 grid steps
    whenever batch >= 2 (both TensorCores active on v7x)."""
    bt = min(_MAX_BLOCK_B, max(1, batch // 2))
    while batch % bt:
        bt -= 1
    return bt


def _pack_small_params(params, d):
    """Pack the small per-layer vectors as COLUMNS of one (d, 128) f32 tile
    (column layout matches the transposed activation layout in the kernel)."""
    (_, _, _b1, g1, be1, _, b2, g2, be2, _, b3, g3, be3, w4, b4) = params
    cols = []
    for v in (g1, be1, b2, g2, be2, b3, g3, be3, w4, b4):
        v = jnp.reshape(v, (-1,)).astype(jnp.float32)
        cols.append(jnp.pad(v, (0, d - v.shape[0])))
    packed = jnp.stack(cols, axis=1)                       # (d, 10)
    return jnp.pad(packed, ((0, 0), (0, _VEC_LANES - packed.shape[1])))


@jax.jit
def importance_scorer(patches, params):
    """patches: (B, N, D) float32 -> scores: (B, N) float32."""
    B, N, D = patches.shape
    (pos, w1, b1, *_rest) = params
    w2, w3 = params[5], params[9]

    bt = _pick_block_b(B)
    G, L = B // bt, bt * N

    # Fold pos into the first-layer bias: (x+pos)@W1 + b1 = x@W1 + (pos@W1+b1).
    posb = jnp.dot(pos[0], w1, precision=_HP) + b1          # (N, D)
    posb_tiled = jnp.tile(posb.T, (1, bt))                  # (D, L), item-outer

    # Transposed, lane-stacked activation layout: (G, D, bt*N), item-outer.
    xT = patches.reshape(G, bt, N, D).transpose(0, 3, 1, 2).reshape(G, D, L)

    w1t, w2t, w3t = w1.T, w2.T, w3.T
    vec = _pack_small_params(params, D)

    kernel = functools.partial(_importance_kernel, d=D)
    full2d = lambda shape: pl.BlockSpec(shape, lambda g: (0, 0))

    out = pl.pallas_call(
        kernel,
        out_shape=jax.ShapeDtypeStruct((G, 1, L), jnp.float32),
        grid_spec=pltpu.PrefetchScalarGridSpec(
            num_scalar_prefetch=0,
            grid=(G,),
            in_specs=[
                pl.BlockSpec((1, D, L), lambda g: (g, 0, 0)),   # X^T, batch-tiled
                full2d((D, L)),                                 # folded pos bias
                full2d((D, D)),                                 # W1^T
                full2d((D // 2, D)),                            # W2^T
                full2d((D // 4, D // 2)),                       # W3^T
                full2d(vec.shape),                              # packed vectors
            ],
            out_specs=pl.BlockSpec((1, 1, L), lambda g: (g, 0, 0)),
        ),
        # Per-step buffers <= ~2 MiB double-buffered: default scoped VMEM is ample.
        compiler_params=pltpu.CompilerParams(
            dimension_semantics=("parallel",)),
    )(xT, posb_tiled, w1t, w2t, w3t, vec)
    return out.reshape(B, N)


def init_params(key, patch_dim=PATCH_DIM, n_patches=N_PATCHES):
    """Deterministic synthetic parameters (shapes from the module's __init__)."""
    D, D2, D4 = patch_dim, patch_dim // 2, patch_dim // 4
    ks = jax.random.split(key, 16)

    def lin(kw, kb, fan_in, fan_out):
        bound = 1.0 / jnp.sqrt(fan_in)
        w = jax.random.uniform(kw, (fan_in, fan_out), jnp.float32, -bound, bound)
        b = jax.random.uniform(kb, (1, fan_out), jnp.float32, -bound, bound)
        return w, b

    pos = jax.random.normal(ks[0], (1, n_patches, D), jnp.float32)
    w1, b1 = lin(ks[1], ks[2], D, D)
    w2, b2 = lin(ks[3], ks[4], D, D2)
    w3, b3 = lin(ks[5], ks[6], D2, D4)
    w4, b4 = lin(ks[7], ks[8], D4, 1)
    g1, be1 = jnp.ones((1, D), jnp.float32), jnp.zeros((1, D), jnp.float32)
    g2, be2 = jnp.ones((1, D2), jnp.float32), jnp.zeros((1, D2), jnp.float32)
    g3, be3 = jnp.ones((1, D4), jnp.float32), jnp.zeros((1, D4), jnp.float32)
    return (pos, w1, b1, g1, be1, w2, b2, g2, be2, w3, b3, g3, be3, w4, b4)


def reference_scorer(patches, params):
    """Pure-JAX reference of the PyTorch forward (eval mode, exact-erf GELU)."""
    (pos, w1, b1, g1, be1, w2, b2, g2, be2, w3, b3, g3, be3, w4, b4) = params
    x = patches + pos
    h = jnp.dot(x, w1, precision=_HP) + b1
    h = jax.nn.gelu(_layernorm(h, g1, be1, axis=-1), approximate=False)
    h = jnp.dot(h, w2, precision=_HP) + b2
    h = jax.nn.gelu(_layernorm(h, g2, be2, axis=-1), approximate=False)
    h = jnp.dot(h, w3, precision=_HP) + b3
    h = jax.nn.gelu(_layernorm(h, g3, be3, axis=-1), approximate=False)
    return jax.nn.sigmoid(jnp.dot(h, w4, precision=_HP) + b4)[..., 0]


if __name__ == "__main__":
    key = jax.random.PRNGKey(0)
    k_in, k_par = jax.random.split(key)
    params = init_params(k_par)

    # Kernel uses tanh-GELU (EUP) vs. the exact-erf reference: deviation is
    # well under 1e-3 post-sigmoid; assert with a small margin.
    TOL = 2e-3

    # Small demo batch (block_b = 1, 2 grid steps).
    B = 2
    patches = jax.random.normal(k_in, (B, N_PATCHES, PATCH_DIM), jnp.float32)
    scores = importance_scorer(patches, params)
    jax.block_until_ready(scores)
    ref = reference_scorer(patches, params)
    assert scores.shape == (B, N_PATCHES)
    assert jnp.allclose(scores, ref, rtol=TOL, atol=TOL), "mismatch vs reference"

    # Exercise the batch-tiled (block_b > 1) lane-stacked path as well.
    B2 = 8
    patches2 = jax.random.normal(jax.random.PRNGKey(1),
                                 (B2, N_PATCHES, PATCH_DIM), jnp.float32)
    scores2 = importance_scorer(patches2, params)
    jax.block_until_ready(scores2)
    ref2 = reference_scorer(patches2, params)
    assert scores2.shape == (B2, N_PATCHES)
    assert jnp.allclose(scores2, ref2, rtol=TOL, atol=TOL), "mismatch (tiled)"

    print("KERNEL_OK")
</pallas_src>

<mosaic_0001>
module attributes {stable_mosaic.version = 11 : i64} {
  func.func @_importance_kernel(%arg0: i32, %arg1: memref<1x32x196xf32, #tpu.memory_space<vmem>>, %arg2: memref<32x196xf32, #tpu.memory_space<vmem>>, %arg3: memref<32x32xf32, #tpu.memory_space<vmem>>, %arg4: memref<16x32xf32, #tpu.memory_space<vmem>>, %arg5: memref<8x16xf32, #tpu.memory_space<vmem>>, %arg6: memref<32x128xf32, #tpu.memory_space<vmem>>, %arg7: memref<1x1x196xf32, #tpu.memory_space<vmem>>) attributes {dimension_semantics = [#tpu.dimension_semantics<parallel>], iteration_bounds = array<i64: 2>, scalar_prefetch = 0 : i64, scratch_operands = 0 : i64, tpu.core_type = #tpu.core_type<tc>, window_params = [{transform_indices = @transform_0, window_bounds = array<i64: 1, 32, 196>}, {pipeline_mode = #tpu.pipeline_mode<synchronous>, transform_indices = @transform_1, window_bounds = array<i64: 32, 196>}, {pipeline_mode = #tpu.pipeline_mode<synchronous>, transform_indices = @transform_2, window_bounds = array<i64: 32, 32>}, {pipeline_mode = #tpu.pipeline_mode<synchronous>, transform_indices = @transform_3, window_bounds = array<i64: 16, 32>}, {pipeline_mode = #tpu.pipeline_mode<synchronous>, transform_indices = @transform_4, window_bounds = array<i64: 8, 16>}, {pipeline_mode = #tpu.pipeline_mode<synchronous>, transform_indices = @transform_5, window_bounds = array<i64: 32, 128>}, {transform_indices = @transform_6, window_bounds = array<i64: 1, 1, 196>}]} {
    %c0 = arith.constant 0 : index
    %c0_0 = arith.constant 0 : index
    %c0_1 = arith.constant 0 : index
    %0 = vector.load %arg1[%c0, %c0_0, %c0_1] : memref<1x32x196xf32, #tpu.memory_space<vmem>>, vector<1x32x196xf32>
    %1 = vector.shape_cast %0 : vector<1x32x196xf32> to vector<32x196xf32>
    %c0_2 = arith.constant 0 : index
    %c0_3 = arith.constant 0 : index
    %2 = vector.load %arg6[%c0_2, %c0_3] : memref<32x128xf32, #tpu.memory_space<vmem>>, vector<32x128xf32>
    %3 = vector.extract_strided_slice %2 {offsets = [0, 0], sizes = [32, 1], strides = [1, 1]} : vector<32x128xf32> to vector<32x1xf32>
    %4 = vector.extract_strided_slice %2 {offsets = [0, 1], sizes = [32, 1], strides = [1, 1]} : vector<32x128xf32> to vector<32x1xf32>
    %5 = vector.extract_strided_slice %2 {offsets = [0, 2], sizes = [16, 1], strides = [1, 1]} : vector<32x128xf32> to vector<16x1xf32>
    %6 = vector.extract_strided_slice %2 {offsets = [0, 3], sizes = [16, 1], strides = [1, 1]} : vector<32x128xf32> to vector<16x1xf32>
    %7 = vector.extract_strided_slice %2 {offsets = [0, 4], sizes = [16, 1], strides = [1, 1]} : vector<32x128xf32> to vector<16x1xf32>
    %8 = vector.extract_strided_slice %2 {offsets = [0, 5], sizes = [8, 1], strides = [1, 1]} : vector<32x128xf32> to vector<8x1xf32>
    %9 = vector.extract_strided_slice %2 {offsets = [0, 6], sizes = [8, 1], strides = [1, 1]} : vector<32x128xf32> to vector<8x1xf32>
    %10 = vector.extract_strided_slice %2 {offsets = [0, 7], sizes = [8, 1], strides = [1, 1]} : vector<32x128xf32> to vector<8x1xf32>
    %11 = vector.extract_strided_slice %2 {offsets = [0, 8], sizes = [8, 1], strides = [1, 1]} : vector<32x128xf32> to vector<8x1xf32>
    %12 = vector.extract_strided_slice %2 {offsets = [0, 9], sizes = [1, 1], strides = [1, 1]} : vector<32x128xf32> to vector<1x1xf32>
    %c0_4 = arith.constant 0 : index
    %c0_5 = arith.constant 0 : index
    %13 = vector.load %arg3[%c0_4, %c0_5] : memref<32x32xf32, #tpu.memory_space<vmem>>, vector<32x32xf32>
    %cst = arith.constant dense<0.000000e+00> : vector<32x196xf32>
    %14 = tpu.matmul %13, %1, %cst {dimension_numbers = #tpu.dot_dimension_numbers<[1], [0], [0], [1], [0, 0, 1, 1], [], []>, precision = #tpu.contract_precision<fp32>} : vector<32x32xf32>, vector<32x196xf32>, vector<32x196xf32> -> vector<32x196xf32>
    %c0_6 = arith.constant 0 : index
    %c0_7 = arith.constant 0 : index
    %15 = vector.load %arg2[%c0_6, %c0_7] : memref<32x196xf32, #tpu.memory_space<vmem>>, vector<32x196xf32>
    %16 = arith.addf %14, %15 : vector<32x196xf32>
    %cst_8 = arith.constant dense<0.000000e+00> : vector<196xf32>
    %17 = vector.multi_reduction <add>, %16, %cst_8 [0] : vector<32x196xf32> to vector<196xf32>
    %18 = vector.shape_cast %17 : vector<196xf32> to vector<1x196xf32>
    %cst_9 = arith.constant 3.200000e+01 : f32
    %19 = vector.broadcast %cst_9 : f32 to vector<1x196xf32>
    %20 = arith.divf %18, %19 : vector<1x196xf32>
    %21 = vector.broadcast %20 : vector<1x196xf32> to vector<32x196xf32>
    %22 = arith.subf %16, %21 : vector<32x196xf32>
    %23 = arith.mulf %22, %22 : vector<32x196xf32>
    %cst_10 = arith.constant dense<0.000000e+00> : vector<196xf32>
    %24 = vector.multi_reduction <add>, %23, %cst_10 [0] : vector<32x196xf32> to vector<196xf32>
    %25 = vector.shape_cast %24 : vector<196xf32> to vector<1x196xf32>
    %cst_11 = arith.constant 3.200000e+01 : f32
    %26 = vector.broadcast %cst_11 : f32 to vector<1x196xf32>
    %27 = arith.divf %25, %26 : vector<1x196xf32>
    %28 = vector.broadcast %20 : vector<1x196xf32> to vector<32x196xf32>
    %29 = arith.subf %16, %28 : vector<32x196xf32>
    %cst_12 = arith.constant 9.99999974E-6 : f32
    %30 = vector.broadcast %cst_12 : f32 to vector<1x196xf32>
    %31 = arith.addf %27, %30 : vector<1x196xf32>
    %32 = math.rsqrt %31 : vector<1x196xf32>
    %33 = vector.broadcast %32 : vector<1x196xf32> to vector<32x196xf32>
    %34 = arith.mulf %29, %33 : vector<32x196xf32>
    %35 = vector.broadcast %3 : vector<32x1xf32> to vector<32x196xf32>
    %36 = arith.mulf %34, %35 : vector<32x196xf32>
    %37 = vector.broadcast %4 : vector<32x1xf32> to vector<32x196xf32>
    %38 = arith.addf %36, %37 : vector<32x196xf32>
    %39 = arith.mulf %38, %38 : vector<32x196xf32>
    %40 = arith.mulf %38, %39 : vector<32x196xf32>
    %cst_13 = arith.constant 4.471500e-02 : f32
    %41 = vector.broadcast %cst_13 : f32 to vector<32x196xf32>
    %42 = arith.mulf %41, %40 : vector<32x196xf32>
    %43 = arith.addf %38, %42 : vector<32x196xf32>
    %cst_14 = arith.constant 0.797884583 : f32
    %44 = vector.broadcast %cst_14 : f32 to vector<32x196xf32>
    %45 = arith.mulf %44, %43 : vector<32x196xf32>
    %46 = math.tanh %45 : vector<32x196xf32>
    %cst_15 = arith.constant 1.000000e+00 : f32
    %47 = vector.broadcast %cst_15 : f32 to vector<32x196xf32>
    %48 = arith.addf %47, %46 : vector<32x196xf32>
    %cst_16 = arith.constant 5.000000e-01 : f32
    %49 = vector.broadcast %cst_16 : f32 to vector<32x196xf32>
    %50 = arith.mulf %49, %48 : vector<32x196xf32>
    %51 = arith.mulf %38, %50 : vector<32x196xf32>
    %c0_17 = arith.constant 0 : index
    %c0_18 = arith.constant 0 : index
    %52 = vector.load %arg4[%c0_17, %c0_18] : memref<16x32xf32, #tpu.memory_space<vmem>>, vector<16x32xf32>
    %cst_19 = arith.constant dense<0.000000e+00> : vector<16x196xf32>
    %53 = tpu.matmul %52, %51, %cst_19 {dimension_numbers = #tpu.dot_dimension_numbers<[1], [0], [0], [1], [0, 0, 1, 1], [], []>, precision = #tpu.contract_precision<fp32>} : vector<16x32xf32>, vector<32x196xf32>, vector<16x196xf32> -> vector<16x196xf32>
    %54 = vector.broadcast %5 : vector<16x1xf32> to vector<16x196xf32>
    %55 = arith.addf %53, %54 : vector<16x196xf32>
    %cst_20 = arith.constant dense<0.000000e+00> : vector<196xf32>
    %56 = vector.multi_reduction <add>, %55, %cst_20 [0] : vector<16x196xf32> to vector<196xf32>
    %57 = vector.shape_cast %56 : vector<196xf32> to vector<1x196xf32>
    %cst_21 = arith.constant 1.600000e+01 : f32
    %58 = vector.broadcast %cst_21 : f32 to vector<1x196xf32>
    %59 = arith.divf %57, %58 : vector<1x196xf32>
    %60 = vector.broadcast %59 : vector<1x196xf32> to vector<16x196xf32>
    %61 = arith.subf %55, %60 : vector<16x196xf32>
    %62 = arith.mulf %61, %61 : vector<16x196xf32>
    %cst_22 = arith.constant dense<0.000000e+00> : vector<196xf32>
    %63 = vector.multi_reduction <add>, %62, %cst_22 [0] : vector<16x196xf32> to vector<196xf32>
    %64 = vector.shape_cast %63 : vector<196xf32> to vector<1x196xf32>
    %cst_23 = arith.constant 1.600000e+01 : f32
    %65 = vector.broadcast %cst_23 : f32 to vector<1x196xf32>
    %66 = arith.divf %64, %65 : vector<1x196xf32>
    %67 = vector.broadcast %59 : vector<1x196xf32> to vector<16x196xf32>
    %68 = arith.subf %55, %67 : vector<16x196xf32>
    %cst_24 = arith.constant 9.99999974E-6 : f32
    %69 = vector.broadcast %cst_24 : f32 to vector<1x196xf32>
    %70 = arith.addf %66, %69 : vector<1x196xf32>
    %71 = math.rsqrt %70 : vector<1x196xf32>
    %72 = vector.broadcast %71 : vector<1x196xf32> to vector<16x196xf32>
    %73 = arith.mulf %68, %72 : vector<16x196xf32>
    %74 = vector.broadcast %6 : vector<16x1xf32> to vector<16x196xf32>
    %75 = arith.mulf %73, %74 : vector<16x196xf32>
    %76 = vector.broadcast %7 : vector<16x1xf32> to vector<16x196xf32>
    %77 = arith.addf %75, %76 : vector<16x196xf32>
    %78 = arith.mulf %77, %77 : vector<16x196xf32>
    %79 = arith.mulf %77, %78 : vector<16x196xf32>
    %cst_25 = arith.constant 4.471500e-02 : f32
    %80 = vector.broadcast %cst_25 : f32 to vector<16x196xf32>
    %81 = arith.mulf %80, %79 : vector<16x196xf32>
    %82 = arith.addf %77, %81 : vector<16x196xf32>
    %cst_26 = arith.constant 0.797884583 : f32
    %83 = vector.broadcast %cst_26 : f32 to vector<16x196xf32>
    %84 = arith.mulf %83, %82 : vector<16x196xf32>
    %85 = math.tanh %84 : vector<16x196xf32>
    %cst_27 = arith.constant 1.000000e+00 : f32
    %86 = vector.broadcast %cst_27 : f32 to vector<16x196xf32>
    %87 = arith.addf %86, %85 : vector<16x196xf32>
    %cst_28 = arith.constant 5.000000e-01 : f32
    %88 = vector.broadcast %cst_28 : f32 to vector<16x196xf32>
    %89 = arith.mulf %88, %87 : vector<16x196xf32>
    %90 = arith.mulf %77, %89 : vector<16x196xf32>
    %c0_29 = arith.constant 0 : index
    %c0_30 = arith.constant 0 : index
    %91 = vector.load %arg5[%c0_29, %c0_30] : memref<8x16xf32, #tpu.memory_space<vmem>>, vector<8x16xf32>
    %cst_31 = arith.constant dense<0.000000e+00> : vector<8x196xf32>
    %92 = tpu.matmul %91, %90, %cst_31 {dimension_numbers = #tpu.dot_dimension_numbers<[1], [0], [0], [1], [0, 0, 1, 1], [], []>, precision = #tpu.contract_precision<fp32>} : vector<8x16xf32>, vector<16x196xf32>, vector<8x196xf32> -> vector<8x196xf32>
    %93 = vector.broadcast %8 : vector<8x1xf32> to vector<8x196xf32>
    %94 = arith.addf %92, %93 : vector<8x196xf32>
    %cst_32 = arith.constant dense<0.000000e+00> : vector<196xf32>
    %95 = vector.multi_reduction <add>, %94, %cst_32 [0] : vector<8x196xf32> to vector<196xf32>
    %96 = vector.shape_cast %95 : vector<196xf32> to vector<1x196xf32>
    %cst_33 = arith.constant 8.000000e+00 : f32
    %97 = vector.broadcast %cst_33 : f32 to vector<1x196xf32>
    %98 = arith.divf %96, %97 : vector<1x196xf32>
    %99 = vector.broadcast %98 : vector<1x196xf32> to vector<8x196xf32>
    %100 = arith.subf %94, %99 : vector<8x196xf32>
    %101 = arith.mulf %100, %100 : vector<8x196xf32>
    %cst_34 = arith.constant dense<0.000000e+00> : vector<196xf32>
    %102 = vector.multi_reduction <add>, %101, %cst_34 [0] : vector<8x196xf32> to vector<196xf32>
    %103 = vector.shape_cast %102 : vector<196xf32> to vector<1x196xf32>
    %cst_35 = arith.constant 8.000000e+00 : f32
    %104 = vector.broadcast %cst_35 : f32 to vector<1x196xf32>
    %105 = arith.divf %103, %104 : vector<1x196xf32>
    %106 = vector.broadcast %98 : vector<1x196xf32> to vector<8x196xf32>
    %107 = arith.subf %94, %106 : vector<8x196xf32>
    %cst_36 = arith.constant 9.99999974E-6 : f32
    %108 = vector.broadcast %cst_36 : f32 to vector<1x196xf32>
    %109 = arith.addf %105, %108 : vector<1x196xf32>
    %110 = math.rsqrt %109 : vector<1x196xf32>
    %111 = vector.broadcast %110 : vector<1x196xf32> to vector<8x196xf32>
    %112 = arith.mulf %107, %111 : vector<8x196xf32>
    %113 = vector.broadcast %9 : vector<8x1xf32> to vector<8x196xf32>
    %114 = arith.mulf %112, %113 : vector<8x196xf32>
    %115 = vector.broadcast %10 : vector<8x1xf32> to vector<8x196xf32>
    %116 = arith.addf %114, %115 : vector<8x196xf32>
    %117 = arith.mulf %116, %116 : vector<8x196xf32>
    %118 = arith.mulf %116, %117 : vector<8x196xf32>
    %cst_37 = arith.constant 4.471500e-02 : f32
    %119 = vector.broadcast %cst_37 : f32 to vector<8x196xf32>
    %120 = arith.mulf %119, %118 : vector<8x196xf32>
    %121 = arith.addf %116, %120 : vector<8x196xf32>
    %cst_38 = arith.constant 0.797884583 : f32
    %122 = vector.broadcast %cst_38 : f32 to vector<8x196xf32>
    %123 = arith.mulf %122, %121 : vector<8x196xf32>
    %124 = math.tanh %123 : vector<8x196xf32>
    %cst_39 = arith.constant 1.000000e+00 : f32
    %125 = vector.broadcast %cst_39 : f32 to vector<8x196xf32>
    %126 = arith.addf %125, %124 : vector<8x196xf32>
    %cst_40 = arith.constant 5.000000e-01 : f32
    %127 = vector.broadcast %cst_40 : f32 to vector<8x196xf32>
    %128 = arith.mulf %127, %126 : vector<8x196xf32>
    %129 = arith.mulf %116, %128 : vector<8x196xf32>
    %130 = vector.broadcast %11 : vector<8x1xf32> to vector<8x196xf32>
    %131 = arith.mulf %129, %130 : vector<8x196xf32>
    %cst_41 = arith.constant dense<0.000000e+00> : vector<196xf32>
    %132 = vector.multi_reduction <add>, %131, %cst_41 [0] : vector<8x196xf32> to vector<196xf32>
    %133 = vector.shape_cast %132 : vector<196xf32> to vector<1x196xf32>
    %134 = vector.broadcast %12 : vector<1x1xf32> to vector<1x196xf32>
    %135 = arith.addf %133, %134 : vector<1x196xf32>
    %136 = arith.negf %135 : vector<1x196xf32>
    %137 = math.exp %136 : vector<1x196xf32>
    %cst_42 = arith.constant 1.000000e+00 : f32
    %138 = vector.broadcast %cst_42 : f32 to vector<1x196xf32>
    %139 = arith.addf %138, %137 : vector<1x196xf32>
    %140 = arith.divf %138, %139 : vector<1x196xf32>
    %c0_43 = arith.constant 0 : index
    %c0_44 = arith.constant 0 : index
    %c0_45 = arith.constant 0 : index
    %141 = vector.load %arg7[%c0_43, %c0_44, %c0_45] : memref<1x1x196xf32, #tpu.memory_space<vmem>>, vector<1x1x196xf32>
    %142 = vector.shape_cast %141 : vector<1x1x196xf32> to vector<1x196xf32>
    %143 = vector.shape_cast %140 : vector<1x196xf32> to vector<1x1x196xf32>
    tpu.vector_store %arg7[%c0_43, %c0_44, %c0_45], %143 {strides = array<i32>} : memref<1x1x196xf32, #tpu.memory_space<vmem>>, vector<1x1x196xf32>,
    return
  }
  func.func @transform_0(%arg0: i32) -> (i32, i32, i32) {
    %c0_i32 = arith.constant 0 : i32
    %c0_i32_0 = arith.constant 0 : i32
    %c0_i32_1 = arith.constant 0 : i32
    return %arg0, %c0_i32, %c0_i32_0 : i32, i32, i32
  }
  func.func @transform_1(%arg0: i32) -> (i32, i32) {
    %c0_i32 = arith.constant 0 : i32
    %c0_i32_0 = arith.constant 0 : i32
    %c0_i32_1 = arith.constant 0 : i32
    return %c0_i32, %c0_i32_0 : i32, i32
  }
  func.func @transform_2(%arg0: i32) -> (i32, i32) {
    %c0_i32 = arith.constant 0 : i32
    %c0_i32_0 = arith.constant 0 : i32
    %c0_i32_1 = arith.constant 0 : i32
    return %c0_i32, %c0_i32_0 : i32, i32
  }
  func.func @transform_3(%arg0: i32) -> (i32, i32) {
    %c0_i32 = arith.constant 0 : i32
    %c0_i32_0 = arith.constant 0 : i32
    %c0_i32_1 = arith.constant 0 : i32
    return %c0_i32, %c0_i32_0 : i32, i32
  }
  func.func @transform_4(%arg0: i32) -> (i32, i32) {
    %c0_i32 = arith.constant 0 : i32
    %c0_i32_0 = arith.constant 0 : i32
    %c0_i32_1 = arith.constant 0 : i32
    return %c0_i32, %c0_i32_0 : i32, i32
  }
  func.func @transform_5(%arg0: i32) -> (i32, i32) {
    %c0_i32 = arith.constant 0 : i32
    %c0_i32_0 = arith.constant 0 : i32
    %c0_i32_1 = arith.constant 0 : i32
    return %c0_i32, %c0_i32_0 : i32, i32
  }
  func.func @transform_6(%arg0: i32) -> (i32, i32, i32) {
    %c0_i32 = arith.constant 0 : i32
    %c0_i32_0 = arith.constant 0 : i32
    %c0_i32_1 = arith.constant 0 : i32
    return %arg0, %c0_i32, %c0_i32_0 : i32, i32, i32
  }
}

</mosaic_0001>

<llo_original>
// kernel: importance_scorer.1
$region0: #{importance_scorer.1}
  #allocation0 [shape = 'u32[]', space=smem, size = 0x4, offset = 0x4, fixed_abs, tag = 'smem constant byte address 0x4 - core index']
  #allocation1 [shape = 'u32[144,128]{1,0:T(1,128)}', space=vmem, size = 0x12000, scoped, tag = 'internal scratch']
  %s0 = inlined_call_operand.vmem [shape: f32[2,32,196], index: 0, kind: input, shape index: {}]
  %s1 = inlined_call_operand.vmem [shape: f32[32,196], index: 1, kind: input, shape index: {}]
  %s2 = inlined_call_operand.vmem [shape: f32[32,32], index: 2, kind: input, shape index: {}]
  %s3 = inlined_call_operand.vmem [shape: f32[16,32], index: 3, kind: input, shape index: {}]
  %s4 = inlined_call_operand.vmem [shape: f32[8,16], index: 4, kind: input, shape index: {}]
  %s5 = inlined_call_operand.vmem [shape: f32[32,128], index: 5, kind: input, shape index: {}]
  %s6 = inlined_call_operand.vmem [shape: f32[2,1,196], index: 6, kind: output, shape index: {}]
  %s7 = sld [smem:[#allocation0]]
  $region57: #{importance_scorer.1} parent=0
    _
  %s9 = ssub.s32 1, %s7
  %s10 = scalar_select 0, %s9, %s7
  loop: start=0, step=1, limit=4
  $region2: #{importance_scorer.1} parent=0 // loop_pre_header
    _
  $region3: #{importance_scorer.1} parent=0 // loop_header
    %s12 = sphi 0, %s16
    %p13 = scmp.ge.s32.totalorder %s12, 4
    %s22 = sphi 0, %s24
    %s25 = sphi 0, %s22
    %s26 = sphi 0, %s25
    %s42 = sphi 0, %s26
    %s46 = sphi 0, %s46
    %s48 = sphi 0, %s46
    %s49 = sphi 0, %s48
    %s63 = sphi 0, %s49
    %s67 = sphi 0, %s67
    %s69 = sphi 0, %s67
    %s70 = sphi 0, %s69
    %s84 = sphi 0, %s70
    %s88 = sphi 0, %s88
    %s90 = sphi 0, %s88
    %s91 = sphi 0, %s90
    %s105 = sphi 0, %s91
    %s109 = sphi 0, %s109
    %s111 = sphi 0, %s109
    %s112 = sphi 0, %s111
    %s126 = sphi 0, %s112
    %s130 = sphi 0, %s130
    %s132 = sphi 0, %s130
    %s133 = sphi 0, %s132
    %s147 = sphi 0, %s133
    %s153 = sphi 0, %s155
    %s156 = sphi 0, %s153
    %s157 = sphi 0, %s156
    %s173 = sphi 0, %s157
  $region4: #{importance_scorer.1} parent=0 // loop_header_branch
    %15 = sbr.rel (%p13) target = $region8
  $region5: #{importance_scorer.1} parent=0 // loop_body
    %s17 = ssub.s32 %s12, 1
    %s18 = ssub.s32 %s12, 2
    %s19 = sadd.s32 %s12, 1
    %s20 = ssub.s32 %s12, %s19
    %p21 = scmp.eq.s32.totalorder %s20, 0
    %s23 = sadd.s32 %s22, 1
    %s24 = scalar_select %p21, %s22, %s23
    %p27 = pneg %p21
    %p28 = scmp.eq.s32.totalorder %s12, 1
    %p29 = por %p27, %p28
    %p30 = scmp.ne.s32.totalorder %s22, %s25
    %p31 = scmp.eq.s32.totalorder %s12, 0
    %p32 = por %p30, %p31
    %p33 = scmp.ne.s32.totalorder %s22, %s25
    %p34 = scmp.eq.s32.totalorder %s17, 1
    %p35 = por %p33, %p34
    %p36 = scmp.ne.s32.totalorder %s25, %s26
    %p37 = scmp.eq.s32.totalorder %s17, 0
    %p38 = por %p36, %p37
    %p39 = scmp.ne.s32.totalorder %s25, %s26
    %p40 = scmp.eq.s32.totalorder %s18, 1
    %p41 = por %p39, %p40
    %p43 = scmp.ne.s32.totalorder %s26, %s42
    %p44 = scmp.eq.s32.totalorder %s18, 0
    %p45 = por %p43, %p44
    %s47 = sadd.s32 %s46, 1
    %p50 = scmp.eq.s32.totalorder %s12, 1
    %p51 = scmp.ne.s32.totalorder %s46, %s48
    %p52 = scmp.eq.s32.totalorder %s12, 0
    %p53 = por %p51, %p52
    %p54 = scmp.ne.s32.totalorder %s46, %s48
    %p55 = scmp.eq.s32.totalorder %s17, 1
    %p56 = por %p54, %p55
    %p57 = scmp.ne.s32.totalorder %s48, %s49
    %p58 = scmp.eq.s32.totalorder %s17, 0
    %p59 = por %p57, %p58
    %p60 = scmp.ne.s32.totalorder %s48, %s49
    %p61 = scmp.eq.s32.totalorder %s18, 1
    %p62 = por %p60, %p61
    %p64 = scmp.ne.s32.totalorder %s49, %s63
    %p65 = scmp.eq.s32.totalorder %s18, 0
    %p66 = por %p64, %p65
    %s68 = sadd.s32 %s67, 1
    %p71 = scmp.eq.s32.totalorder %s12, 1
    %p72 = scmp.ne.s32.totalorder %s67, %s69
    %p73 = scmp.eq.s32.totalorder %s12, 0
    %p74 = por %p72, %p73
    %p75 = scmp.ne.s32.totalorder %s67, %s69
    %p76 = scmp.eq.s32.totalorder %s17, 1
    %p77 = por %p75, %p76
    %p78 = scmp.ne.s32.totalorder %s69, %s70
    %p79 = scmp.eq.s32.totalorder %s17, 0
    %p80 = por %p78, %p79
    %p81 = scmp.ne.s32.totalorder %s69, %s70
    %p82 = scmp.eq.s32.totalorder %s18, 1
    %p83 = por %p81, %p82
    %p85 = scmp.ne.s32.totalorder %s70, %s84
    %p86 = scmp.eq.s32.totalorder %s18, 0
    %p87 = por %p85, %p86
    %s89 = sadd.s32 %s88, 1
    %p92 = scmp.eq.s32.totalorder %s12, 1
    %p93 = scmp.ne.s32.totalorder %s88, %s90
    %p94 = scmp.eq.s32.totalorder %s12, 0
    %p95 = por %p93, %p94
    %p96 = scmp.ne.s32.totalorder %s88, %s90
    %p97 = scmp.eq.s32.totalorder %s17, 1
    %p98 = por %p96, %p97
    %p99 = scmp.ne.s32.totalorder %s90, %s91
    %p100 = scmp.eq.s32.totalorder %s17, 0
    %p101 = por %p99, %p100
    %p102 = scmp.ne.s32.totalorder %s90, %s91
    %p103 = scmp.eq.s32.totalorder %s18, 1
    %p104 = por %p102, %p103
    %p106 = scmp.ne.s32.totalorder %s91, %s105
    %p107 = scmp.eq.s32.totalorder %s18, 0
    %p108 = por %p106, %p107
    %s110 = sadd.s32 %s109, 1
    %p113 = scmp.eq.s32.totalorder %s12, 1
    %p114 = scmp.ne.s32.totalorder %s109, %s111
    %p115 = scmp.eq.s32.totalorder %s12, 0
    %p116 = por %p114, %p115
    %p117 = scmp.ne.s32.totalorder %s109, %s111
    %p118 = scmp.eq.s32.totalorder %s17, 1
    %p119 = por %p117, %p118
    %p120 = scmp.ne.s32.totalorder %s111, %s112
    %p121 = scmp.eq.s32.totalorder %s17, 0
    %p122 = por %p120, %p121
    %p123 = scmp.ne.s32.totalorder %s111, %s112
    %p124 = scmp.eq.s32.totalorder %s18, 1
    %p125 = por %p123, %p124
    %p127 = scmp.ne.s32.totalorder %s112, %s126
    %p128 = scmp.eq.s32.totalorder %s18, 0
    %p129 = por %p127, %p128
    %s131 = sadd.s32 %s130, 1
    %p134 = scmp.eq.s32.totalorder %s12, 1
    %p135 = scmp.ne.s32.totalorder %s130, %s132
    %p136 = scmp.eq.s32.totalorder %s12, 0
    %p137 = por %p135, %p136
    %p138 = scmp.ne.s32.totalorder %s130, %s132
    %p139 = scmp.eq.s32.totalorder %s17, 1
    %p140 = por %p138, %p139
    %p141 = scmp.ne.s32.totalorder %s132, %s133
    %p142 = scmp.eq.s32.totalorder %s17, 0
    %p143 = por %p141, %p142
    %p144 = scmp.ne.s32.totalorder %s132, %s133
    %p145 = scmp.eq.s32.totalorder %s18, 1
    %p146 = por %p144, %p145
    %p148 = scmp.ne.s32.totalorder %s133, %s147
    %p149 = scmp.eq.s32.totalorder %s18, 0
    %p150 = por %p148, %p149
    %s151 = ssub.s32 %s12, %s19
    %p152 = scmp.eq.s32.totalorder %s151, 0
    %s154 = sadd.s32 %s153, 1
    %s155 = scalar_select %p152, %s153, %s154
    %p158 = pneg %p152
    %p159 = scmp.eq.s32.totalorder %s12, 1
    %p160 = por %p158, %p159
    %p161 = scmp.ne.s32.totalorder %s153, %s156
    %p162 = scmp.eq.s32.totalorder %s12, 0
    %p163 = por %p161, %p162
    %p164 = scmp.ne.s32.totalorder %s153, %s156
    %p165 = scmp.eq.s32.totalorder %s17, 1
    %p166 = por %p164, %p165
    %p167 = scmp.ne.s32.totalorder %s156, %s157
    %p168 = scmp.eq.s32.totalorder %s17, 0
    %p169 = por %p167, %p168
    %p170 = scmp.ne.s32.totalorder %s156, %s157
    %p171 = scmp.eq.s32.totalorder %s18, 1
    %p172 = por %p170, %p171
    %p174 = scmp.ne.s32.totalorder %s157, %s173
    %p175 = scmp.eq.s32.totalorder %s18, 0
    %p176 = por %p174, %p175
    %p177 = scmp.le.s32.totalorder 1, %s12
    %p178 = scmp.lt.s32.totalorder %s12, 3
    %p179 = pnand %p177, %p178
    %p180 = pneg %p179
    // Predicated region
    $region9: #{importance_scorer.1} parent=5 // pred_check
      _
    $region10: #{importance_scorer.1} parent=5 // pred_check_branch
      %182 = sbr.rel (%p179) target = $region12
    $region11: #{importance_scorer.1} parent=5 // pred_region
      %s183 = ssub.s32 %s12, 1
      // Predicated region
      $region13: #{importance_scorer.1} parent=11 // pred_check
        %p184 = pneg %p59
      $region14: #{importance_scorer.1} parent=11 // pred_check_branch
        %186 = sbr.rel (%p184) target = $region16
      $region15: #{importance_scorer.1} parent=11 // pred_region
        _
      $region16: #{importance_scorer.1} parent=11 // pred_fallthru
        _
      // Predicated region
      $region17: #{importance_scorer.1} parent=11 // pred_check
        %p187 = pneg %p80
      $region18: #{importance_scorer.1} parent=11 // pred_check_branch
        %189 = sbr.rel (%p187) target = $region20
      $region19: #{importance_scorer.1} parent=11 // pred_region
        _
      $region20: #{importance_scorer.1} parent=11 // pred_fallthru
        _
      // Predicated region
      $region21: #{importance_scorer.1} parent=11 // pred_check
        %p190 = pneg %p101
      $region22: #{importance_scorer.1} parent=11 // pred_check_branch
        %192 = sbr.rel (%p190) target = $region24
      $region23: #{importance_scorer.1} parent=11 // pred_region
        _
      $region24: #{importance_scorer.1} parent=11 // pred_fallthru
        _
      // Predicated region
      $region25: #{importance_scorer.1} parent=11 // pred_check
        %p193 = pneg %p122
      $region26: #{importance_scorer.1} parent=11 // pred_check_branch
        %195 = sbr.rel (%p193) target = $region28
      $region27: #{importance_scorer.1} parent=11 // pred_region
        _
      $region28: #{importance_scorer.1} parent=11 // pred_fallthru
        _
      // Predicated region
      $region29: #{importance_scorer.1} parent=11 // pred_check
        %p196 = pneg %p143
      $region30: #{importance_scorer.1} parent=11 // pred_check_branch
        %198 = sbr.rel (%p196) target = $region32
      $region31: #{importance_scorer.1} parent=11 // pred_region
        _
      $region32: #{importance_scorer.1} parent=11 // pred_fallthru
        _
    $region12: #{importance_scorer.1} parent=5 // pred_fallthru
      _
    %p199 = scmp.lt.s32.totalorder %s12, 2
    // Predicated region
    $region33: #{importance_scorer.1} parent=5 // pred_check
      %p200 = pneg %p199
    $region34: #{importance_scorer.1} parent=5 // pred_check_branch
      %202 = sbr.rel (%p200) target = $region36
    $region35: #{importance_scorer.1} parent=5 // pred_region
      // Predicated region
      $region37: #{importance_scorer.1} parent=35 // pred_check
        %p203 = pneg %p32
      $region38: #{importance_scorer.1} parent=35 // pred_check_branch
        %205 = sbr.rel (%p203) target = $region40
      $region39: #{importance_scorer.1} parent=35 // pred_region
        %p206 = scmp.lt.s32.totalorder %s12, 1
        %s207 = scalar_select %p206, %s12, 1
        %s208 = smul.addr %s207, 8
        %s209 = smul.addr %s208, 8
        %s210 = scalar_lea.vmem %s0, %s209
      $region40: #{importance_scorer.1} parent=35 // pred_fallthru
        _
    $region36: #{importance_scorer.1} parent=5 // pred_fallthru
      _
    %p211 = scmp.le.s32.totalorder 1, %s12
    %p212 = scmp.lt.s32.totalorder %s12, 3
    %p213 = pnand %p211, %p212
    %p214 = pneg %p213
    // Predicated region
    $region41: #{importance_scorer.1} parent=5 // pred_check
      _
    $region42: #{importance_scorer.1} parent=5 // pred_check_branch
      %216 = sbr.rel (%p213) target = $region44
    $region43: #{importance_scorer.1} parent=5 // pred_region
      %s217 = ssub.s32 %s12, 1
      %p218 = scmp.lt.s32.totalorder %s17, 1
      %s219 = scalar_select %p218, %s17, 1
      %s220 = smul.addr %s219, 8
      %s221 = smul.addr %s220, 8
      %s222 = scalar_lea.vmem %s0, %s221
      %p223 = pneg %p38
      %p224 = pneg %p35
      %p225 = pneg %p59
      %p226 = pneg %p56
      %p227 = pneg %p80
      %p228 = pneg %p77
      %p229 = pneg %p101
      %p230 = pneg %p98
      %p231 = pneg %p122
      %p232 = pneg %p119
      %p233 = pneg %p143
      %p234 = pneg %p140
      %p235 = pneg %p169
      %p236 = pneg %p166
      %p237 = scmp.lt.s32.totalorder %s17, 1
      %s238 = scalar_select %p237, %s17, 1
      %s239 = smul.addr %s238, 2
      %s240 = scalar_lea.vmem %s6, %s239
      %p241 = scmp.lt.s32.totalorder %s17, 1
      %s242 = scalar_select %p241, %s17, 1
      %s243 = smul.addr %s242, 8
      %s244 = smul.addr %s243, 8
      %s245 = scalar_lea.vmem %s0, %s244
      %p246 = scmp.lt.s32.totalorder %s17, 1
      %s247 = scalar_select %p246, %s17, 1
      %s248 = smul.addr %s247, 2
      %s249 = scalar_lea.vmem %s6, %s248
      %v250 = vld [vmem:[%s245] sm:$0xff]
      %v251 = vld [vmem:[%s245 + $0x8] sm:$0xff]
      %v252 = vld [vmem:[%s245 + $0x10] sm:$0xff]
      %v253 = vld [vmem:[%s245 + $0x18] sm:$0xff]
      %v254 = vld [vmem:[%s245 + $0x20] sm:$0xff]
      %v255 = vld [vmem:[%s245 + $0x28] sm:$0xff]
      %v256 = vld [vmem:[%s245 + $0x30] sm:$0xff]
      %v257 = vld [vmem:[%s245 + $0x38] sm:$0xff]
      %v258 = vld [vmem:[%s5] sm:$0xff]
      %v259 = vld [vmem:[%s5 + $0x8] sm:$0xff]
      %v260 = vld [vmem:[%s5 + $0x10] sm:$0xff]
      %v261 = vld [vmem:[%s5 + $0x18] sm:$0xff]
      %v262 = vld [vmem:[%s2] sm:$0xff]
      %v263 = vld [vmem:[%s2 + $0x8] sm:$0xff]
      %v264 = vld [vmem:[%s2 + $0x10] sm:$0xff]
      %v265 = vld [vmem:[%s2 + $0x18] sm:$0xff]
      %v266 = vld [vmem:[%s1] sm:$0xff]
      %v267 = vld [vmem:[%s1 + $0x8] sm:$0xff]
      %v268 = vld [vmem:[%s1 + $0x10] sm:$0xff]
      %v269 = vld [vmem:[%s1 + $0x18] sm:$0xff]
      %v270 = vld [vmem:[%s1 + $0x20] sm:$0xff]
      %v271 = vld [vmem:[%s1 + $0x28] sm:$0xff]
      %v272 = vld [vmem:[%s1 + $0x30] sm:$0xff]
      %v273 = vld [vmem:[%s1 + $0x38] sm:$0xff]
      %vm274 = vcmask 261120
      %v276 = vsel %vm274, %v262, 0
      %v279 = vsel %vm274, %v263, 0
      %v282 = vsel %vm274, %v264, 0
      %v285 = vsel %vm274, %v265, 0
      %287 = vmatprep.subr.mxu0 0.0
      %288 = vmatpush1.msra.mxu0 0.0
      %289 = vmatprep.subr.mxu0 0.0
      %290 = vmatpush1.msra.mxu0 0.0
      %291 = vmatprep.subr.mxu0 0.0
      %292 = vmatpush1.msra.mxu0 0.0
      %293 = vmatprep.subr.mxu0 0.0
      %294 = vmatpush1.msra.mxu0 0.0
      %295 = vmatprep.subr.mxu0 0.0
      %296 = vmatpush1.msra.mxu0 0.0
      %297 = vmatprep.subr.mxu0 0.0
      %298 = vmatpush1.msra.mxu0 0.0
      %299 = vmatprep.subr.mxu0 0.0
      %300 = vmatpush1.msra.mxu0 0.0
      %301 = vmatprep.subr.mxu0 0.0
      %302 = vmatpush1.msra.mxu0 0.0
      %303 = vmatprep.subr.mxu0 0.0
      %304 = vmatpush1.msra.mxu0 0.0
      %305 = vmatprep.subr.mxu0 0.0
      %306 = vmatpush1.msra.mxu0 0.0
      %307 = vmatprep.subr.mxu0 0.0
      %308 = vmatpush1.msra.mxu0 0.0
      %309 = vmatprep.subr.mxu0 0.0
      %310 = vmatpush1.msra.mxu0 0.0
      %v311 = vand.u32 %v257, 4294901760
      %312 = vmatprep.subr.mxu0 %v311
      %v313 = vand.u32 %v256, 4294901760
      %314 = vmatpush1.msra.mxu0 %v313
      %v315 = vand.u32 %v255, 4294901760
      %316 = vmatprep.subr.mxu0 %v315
      %v317 = vand.u32 %v254, 4294901760
      %318 = vmatpush1.msra.mxu0 %v317
      %v319 = vand.u32 %v253, 4294901760
      %320 = vmatprep.subr.mxu0 %v319
      %v321 = vand.u32 %v252, 4294901760
      %322 = vmatpush1.msra.mxu0 %v321
      %v323 = vand.u32 %v251, 4294901760
      %324 = vmatprep.subr.mxu0 %v323
      %v325 = vand.u32 %v250, 4294901760
      %326 = vmatpush1.msra.mxu0 %v325
      %327 = vmatprep.subr.mxu0 0.0
      %328 = vmatpush2.msra.mxu0 0.0
      %329 = vmatprep.subr.mxu0 0.0
      %330 = vmatpush2.msra.mxu0 0.0
      %331 = vmatprep.subr.mxu0 0.0
      %332 = vmatpush2.msra.mxu0 0.0
      %333 = vmatprep.subr.mxu0 0.0
      %334 = vmatpush2.msra.mxu0 0.0
      %335 = vmatprep.subr.mxu0 0.0
      %336 = vmatpush2.msra.mxu0 0.0
      %337 = vmatprep.subr.mxu0 0.0
      %338 = vmatpush2.msra.mxu0 0.0
      %339 = vmatprep.subr.mxu0 0.0
      %340 = vmatpush2.msra.mxu0 0.0
      %341 = vmatprep.subr.mxu0 0.0
      %342 = vmatpush2.msra.mxu0 0.0
      %343 = vmatprep.subr.mxu0 0.0
      %344 = vmatpush2.msra.mxu0 0.0
      %345 = vmatprep.subr.mxu0 0.0
      %346 = vmatpush2.msra.mxu0 0.0
      %347 = vmatprep.subr.mxu0 0.0
      %348 = vmatpush2.msra.mxu0 0.0
      %349 = vmatprep.subr.mxu0 0.0
      %350 = vmatpush2.msra.mxu0 0.0
      %351 = vmatprep.subr.mxu0 0.0
      %352 = vmatpush2.msra.mxu0 0.0
      %353 = vmatprep.subr.mxu0 0.0
      %354 = vmatpush2.msra.mxu0 0.0
      %355 = vmatprep.subr.mxu0 0.0
      %356 = vmatpush2.msra.mxu0 0.0
      %357 = vmatprep.subr.mxu0 0.0
      %358 = vmatpush2.msra.mxu0 0.0
      %359 = vmatprep.mubr.f32.mxu0 0.0
      %v360 = vand.u32 %v276, 4294901760
      %v361 = vsub.f32 %v276, %v360
      %v362 = vand.u32 %v361, 4294901760
      %v363 = vsub.f32 %v361, %v362
      %v364 = vand.u32 %v363, 4294901760
      %365 = vmatmul.mubr.f32.gmra.mxu0 %v364
      %v366 = vpop.f32.mrf.mxu0
      %v367 = vadd.f32 %v266, %v366
      %v368 = vpop.f32.mrf.mxu0
      %v369 = vadd.f32 %v267, %v368
      %370 = vmatprep.mubr.f32.mxu0 0.0
      %v371 = vand.u32 %v279, 4294901760
      %v372 = vsub.f32 %v279, %v371
      %v373 = vand.u32 %v372, 4294901760
      %v374 = vsub.f32 %v372, %v373
      %v375 = vand.u32 %v374, 4294901760
      %376 = vmatmul.mubr.f32.gmra.mxu0 %v375
      %v377 = vpop.f32.mrf.mxu0
      %v378 = vadd.f32 %v268, %v377
      %v379 = vpop.f32.mrf.mxu0
      %v380 = vadd.f32 %v269, %v379
      %381 = vmatprep.mubr.f32.mxu0 0.0
      %v382 = vand.u32 %v282, 4294901760
      %v383 = vsub.f32 %v282, %v382
      %v384 = vand.u32 %v383, 4294901760
      %v385 = vsub.f32 %v383, %v384
      %v386 = vand.u32 %v385, 4294901760
      %387 = vmatmul.mubr.f32.gmra.mxu0 %v386
      %v388 = vpop.f32.mrf.mxu0
      %v389 = vadd.f32 %v270, %v388
      %v390 = vpop.f32.mrf.mxu0
      %v391 = vadd.f32 %v271, %v390
      %392 = vmatprep.mubr.f32.mxu0 0.0
      %v393 = vand.u32 %v285, 4294901760
      %v394 = vsub.f32 %v285, %v393
      %v395 = vand.u32 %v394, 4294901760
      %v396 = vsub.f32 %v394, %v395
      %v397 = vand.u32 %v396, 4294901760
      %398 = vmatmul.mubr.f32.gmra.mxu0 %v397
      %v399 = vpop.f32.mrf.mxu0
      %v400 = vadd.f32 %v272, %v399
      %v401 = vpop.f32.mrf.mxu0
      %v402 = vadd.f32 %v273, %v401
      %403 = vdwg.mxu0
      %404 = vmatprep.subr.mxu0 0.0
      %405 = vmatpush1.msra.mxu0 0.0
      %406 = vmatprep.subr.mxu0 0.0
      %407 = vmatpush1.msra.mxu0 0.0
      %408 = vmatprep.subr.mxu0 0.0
      %409 = vmatpush1.msra.mxu0 0.0
      %410 = vmatprep.subr.mxu0 0.0
      %411 = vmatpush1.msra.mxu0 0.0
      %412 = vmatprep.subr.mxu0 0.0
      %413 = vmatpush1.msra.mxu0 0.0
      %414 = vmatprep.subr.mxu0 0.0
      %415 = vmatpush1.msra.mxu0 0.0
      %416 = vmatprep.subr.mxu0 0.0
      %417 = vmatpush1.msra.mxu0 0.0
      %418 = vmatprep.subr.mxu0 0.0
      %419 = vmatpush1.msra.mxu0 0.0
      %420 = vmatprep.subr.mxu0 0.0
      %421 = vmatpush1.msra.mxu0 0.0
      %422 = vmatprep.subr.mxu0 0.0
      %423 = vmatpush1.msra.mxu0 0.0
      %424 = vmatprep.subr.mxu0 0.0
      %425 = vmatpush1.msra.mxu0 0.0
      %426 = vmatprep.subr.mxu0 0.0
      %427 = vmatpush1.msra.mxu0 0.0
      %v428 = vand.u32 %v257, 4294901760
      %v429 = vsub.f32 %v257, %v428
      %v430 = vand.u32 %v429, 4294901760
      %v431 = vsub.f32 %v429, %v430
      %v432 = vand.u32 %v431, 4294901760
      %433 = vmatprep.subr.mxu0 %v432
      %v434 = vand.u32 %v256, 4294901760
      %v435 = vsub.f32 %v256, %v434
      %v436 = vand.u32 %v435, 4294901760
      %v437 = vsub.f32 %v435, %v436
      %v438 = vand.u32 %v437, 4294901760
      %439 = vmatpush1.msra.mxu0 %v438
      %v440 = vand.u32 %v255, 4294901760
      %v441 = vsub.f32 %v255, %v440
      %v442 = vand.u32 %v441, 4294901760
      %v443 = vsub.f32 %v441, %v442
      %v444 = vand.u32 %v443, 4294901760
      %445 = vmatprep.subr.mxu0 %v444
      %v446 = vand.u32 %v254, 4294901760
      %v447 = vsub.f32 %v254, %v446
      %v448 = vand.u32 %v447, 4294901760
      %v449 = vsub.f32 %v447, %v448
      %v450 = vand.u32 %v449, 4294901760
      %451 = vmatpush1.msra.mxu0 %v450
      %v452 = vand.u32 %v253, 4294901760
      %v453 = vsub.f32 %v253, %v452
      %v454 = vand.u32 %v453, 4294901760
      %v455 = vsub.f32 %v453, %v454
      %v456 = vand.u32 %v455, 4294901760
      %457 = vmatprep.subr.mxu0 %v456
      %v458 = vand.u32 %v252, 4294901760
      %v459 = vsub.f32 %v252, %v458
      %v460 = vand.u32 %v459, 4294901760
      %v461 = vsub.f32 %v459, %v460
      %v462 = vand.u32 %v461, 4294901760
      %463 = vmatpush1.msra.mxu0 %v462
      %v464 = vand.u32 %v251, 4294901760
      %v465 = vsub.f32 %v251, %v464
      %v466 = vand.u32 %v465, 4294901760
      %v467 = vsub.f32 %v465, %v466
      %v468 = vand.u32 %v467, 4294901760
      %469 = vmatprep.subr.mxu0 %v468
      %v470 = vand.u32 %v250, 4294901760
      %v471 = vsub.f32 %v250, %v470
      %v472 = vand.u32 %v471, 4294901760
      %v473 = vsub.f32 %v471, %v472
      %v474 = vand.u32 %v473, 4294901760
      %475 = vmatpush1.msra.mxu0 %v474
      %476 = vmatprep.subr.mxu0 0.0
      %477 = vmatpush2.msra.mxu0 0.0
      %478 = vmatprep.subr.mxu0 0.0
      %479 = vmatpush2.msra.mxu0 0.0
      %480 = vmatprep.subr.mxu0 0.0
      %481 = vmatpush2.msra.mxu0 0.0
      %482 = vmatprep.subr.mxu0 0.0
      %483 = vmatpush2.msra.mxu0 0.0
      %484 = vmatprep.subr.mxu0 0.0
      %485 = vmatpush2.msra.mxu0 0.0
      %486 = vmatprep.subr.mxu0 0.0
      %487 = vmatpush2.msra.mxu0 0.0
      %488 = vmatprep.subr.mxu0 0.0
      %489 = vmatpush2.msra.mxu0 0.0
      %490 = vmatprep.subr.mxu0 0.0
      %491 = vmatpush2.msra.mxu0 0.0
      %492 = vmatprep.subr.mxu0 0.0
      %493 = vmatpush2.msra.mxu0 0.0
      %494 = vmatprep.subr.mxu0 0.0
      %495 = vmatpush2.msra.mxu0 0.0
      %496 = vmatprep.subr.mxu0 0.0
      %497 = vmatpush2.msra.mxu0 0.0
      %498 = vmatprep.subr.mxu0 0.0
      %499 = vmatpush2.msra.mxu0 0.0
      %500 = vmatprep.subr.mxu0 0.0
      %501 = vmatpush2.msra.mxu0 0.0
      %502 = vmatprep.subr.mxu0 0.0
      %503 = vmatpush2.msra.mxu0 0.0
      %504 = vmatprep.subr.mxu0 0.0
      %505 = vmatpush2.msra.mxu0 0.0
      %506 = vmatprep.subr.mxu0 0.0
      %507 = vmatpush2.msra.mxu0 0.0
      %508 = vmatprep.mubr.f32.mxu0 0.0
      %v509 = vand.u32 %v276, 4294901760
      %510 = vmatmul.mubr.f32.gmra.mxu0 %v509
      %v511 = vpop.f32.mrf.mxu0
      %v512 = vadd.f32 %v367, %v511
      %v513 = vpop.f32.mrf.mxu0
      %v514 = vadd.f32 %v369, %v513
      %515 = vmatprep.mubr.f32.mxu0 0.0
      %v516 = vand.u32 %v279, 4294901760
      %517 = vmatmul.mubr.f32.gmra.mxu0 %v516
      %v518 = vpop.f32.mrf.mxu0
      %v519 = vadd.f32 %v378, %v518
      %v520 = vpop.f32.mrf.mxu0
      %v521 = vadd.f32 %v380, %v520
      %522 = vmatprep.mubr.f32.mxu0 0.0
      %v523 = vand.u32 %v282, 4294901760
      %524 = vmatmul.mubr.f32.gmra.mxu0 %v523
      %v525 = vpop.f32.mrf.mxu0
      %v526 = vadd.f32 %v389, %v525
      %v527 = vpop.f32.mrf.mxu0
      %v528 = vadd.f32 %v391, %v527
      %529 = vmatprep.mubr.f32.mxu0 0.0
      %v530 = vand.u32 %v285, 4294901760
      %531 = vmatmul.mubr.f32.gmra.mxu0 %v530
      %v532 = vpop.f32.mrf.mxu0
      %v533 = vadd.f32 %v400, %v532
      %v534 = vpop.f32.mrf.mxu0
      %v535 = vadd.f32 %v402, %v534
      %536 = vdwg.mxu0
      %537 = vmatprep.subr.mxu0 0.0
      %538 = vmatpush1.msra.mxu0 0.0
      %539 = vmatprep.subr.mxu0 0.0
      %540 = vmatpush1.msra.mxu0 0.0
      %541 = vmatprep.subr.mxu0 0.0
      %542 = vmatpush1.msra.mxu0 0.0
      %543 = vmatprep.subr.mxu0 0.0
      %544 = vmatpush1.msra.mxu0 0.0
      %545 = vmatprep.subr.mxu0 0.0
      %546 = vmatpush1.msra.mxu0 0.0
      %547 = vmatprep.subr.mxu0 0.0
      %548 = vmatpush1.msra.mxu0 0.0
      %549 = vmatprep.subr.mxu0 0.0
      %550 = vmatpush1.msra.mxu0 0.0
      %551 = vmatprep.subr.mxu0 0.0
      %552 = vmatpush1.msra.mxu0 0.0
      %553 = vmatprep.subr.mxu0 0.0
      %554 = vmatpush1.msra.mxu0 0.0
      %555 = vmatprep.subr.mxu0 0.0
      %556 = vmatpush1.msra.mxu0 0.0
      %557 = vmatprep.subr.mxu0 0.0
      %558 = vmatpush1.msra.mxu0 0.0
      %559 = vmatprep.subr.mxu0 0.0
      %560 = vmatpush1.msra.mxu0 0.0
      %v561 = vand.u32 %v257, 4294901760
      %v562 = vsub.f32 %v257, %v561
      %563 = vmatprep.subr.mxu0 %v562
      %v564 = vand.u32 %v256, 4294901760
      %v565 = vsub.f32 %v256, %v564
      %566 = vmatpush1.msra.mxu0 %v565
      %v567 = vand.u32 %v255, 4294901760
      %v568 = vsub.f32 %v255, %v567
      %569 = vmatprep.subr.mxu0 %v568
      %v570 = vand.u32 %v254, 4294901760
      %v571 = vsub.f32 %v254, %v570
      %572 = vmatpush1.msra.mxu0 %v571
      %v573 = vand.u32 %v253, 4294901760
      %v574 = vsub.f32 %v253, %v573
      %575 = vmatprep.subr.mxu0 %v574
      %v576 = vand.u32 %v252, 4294901760
      %v577 = vsub.f32 %v252, %v576
      %578 = vmatpush1.msra.mxu0 %v577
      %v579 = vand.u32 %v251, 4294901760
      %v580 = vsub.f32 %v251, %v579
      %581 = vmatprep.subr.mxu0 %v580
      %v582 = vand.u32 %v250, 4294901760
      %v583 = vsub.f32 %v250, %v582
      %584 = vmatpush1.msra.mxu0 %v583
      %585 = vmatprep.subr.mxu0 0.0
      %586 = vmatpush2.msra.mxu0 0.0
      %587 = vmatprep.subr.mxu0 0.0
      %588 = vmatpush2.msra.mxu0 0.0
      %589 = vmatprep.subr.mxu0 0.0
      %590 = vmatpush2.msra.mxu0 0.0
      %591 = vmatprep.subr.mxu0 0.0
      %592 = vmatpush2.msra.mxu0 0.0
      %593 = vmatprep.subr.mxu0 0.0
      %594 = vmatpush2.msra.mxu0 0.0
      %595 = vmatprep.subr.mxu0 0.0
      %596 = vmatpush2.msra.mxu0 0.0
      %597 = vmatprep.subr.mxu0 0.0
      %598 = vmatpush2.msra.mxu0 0.0
      %599 = vmatprep.subr.mxu0 0.0
      %600 = vmatpush2.msra.mxu0 0.0
      %601 = vmatprep.subr.mxu0 0.0
      %602 = vmatpush2.msra.mxu0 0.0
      %603 = vmatprep.subr.mxu0 0.0
      %604 = vmatpush2.msra.mxu0 0.0
      %605 = vmatprep.subr.mxu0 0.0
      %606 = vmatpush2.msra.mxu0 0.0
      %607 = vmatprep.subr.mxu0 0.0
      %608 = vmatpush2.msra.mxu0 0.0
      %609 = vmatprep.subr.mxu0 0.0
      %610 = vmatpush2.msra.mxu0 0.0
      %611 = vmatprep.subr.mxu0 0.0
      %612 = vmatpush2.msra.mxu0 0.0
      %613 = vmatprep.subr.mxu0 0.0
      %614 = vmatpush2.msra.mxu0 0.0
      %615 = vmatprep.subr.mxu0 0.0
      %616 = vmatpush2.msra.mxu0 0.0
      %617 = vmatprep.mubr.f32.mxu0 0.0
      %v618 = vand.u32 %v276, 4294901760
      %v619 = vsub.f32 %v276, %v618
      %620 = vmatmul.mubr.f32.gmra.mxu0 %v619
      %v621 = vpop.f32.mrf.mxu0
      %v622 = vadd.f32 %v512, %v621
      %v623 = vpop.f32.mrf.mxu0
      %v624 = vadd.f32 %v514, %v623
      %625 = vmatprep.mubr.f32.mxu0 0.0
      %v626 = vand.u32 %v279, 4294901760
      %v627 = vsub.f32 %v279, %v626
      %628 = vmatmul.mubr.f32.gmra.mxu0 %v627
      %v629 = vpop.f32.mrf.mxu0
      %v630 = vadd.f32 %v519, %v629
      %v631 = vpop.f32.mrf.mxu0
      %v632 = vadd.f32 %v521, %v631
      %633 = vmatprep.mubr.f32.mxu0 0.0
      %v634 = vand.u32 %v282, 4294901760
      %v635 = vsub.f32 %v282, %v634
      %636 = vmatmul.mubr.f32.gmra.mxu0 %v635
      %v637 = vpop.f32.mrf.mxu0
      %v638 = vadd.f32 %v526, %v637
      %v639 = vpop.f32.mrf.mxu0
      %v640 = vadd.f32 %v528, %v639
      %641 = vmatprep.mubr.f32.mxu0 0.0
      %v642 = vand.u32 %v285, 4294901760
      %v643 = vsub.f32 %v285, %v642
      %644 = vmatmul.mubr.f32.gmra.mxu0 %v643
      %v645 = vpop.f32.mrf.mxu0
      %v646 = vadd.f32 %v533, %v645
      %v647 = vpop.f32.mrf.mxu0
      %v648 = vadd.f32 %v535, %v647
      %649 = vdwg.mxu0
      %650 = vmatprep.subr.mxu0 0.0
      %651 = vmatpush1.msra.mxu0 0.0
      %652 = vmatprep.subr.mxu0 0.0
      %653 = vmatpush1.msra.mxu0 0.0
      %654 = vmatprep.subr.mxu0 0.0
      %655 = vmatpush1.msra.mxu0 0.0
      %656 = vmatprep.subr.mxu0 0.0
      %657 = vmatpush1.msra.mxu0 0.0
      %658 = vmatprep.subr.mxu0 0.0
      %659 = vmatpush1.msra.mxu0 0.0
      %660 = vmatprep.subr.mxu0 0.0
      %661 = vmatpush1.msra.mxu0 0.0
      %662 = vmatprep.subr.mxu0 0.0
      %663 = vmatpush1.msra.mxu0 0.0
      %664 = vmatprep.subr.mxu0 0.0
      %665 = vmatpush1.msra.mxu0 0.0
      %666 = vmatprep.subr.mxu0 0.0
      %667 = vmatpush1.msra.mxu0 0.0
      %668 = vmatprep.subr.mxu0 0.0
      %669 = vmatpush1.msra.mxu0 0.0
      %670 = vmatprep.subr.mxu0 0.0
      %671 = vmatpush1.msra.mxu0 0.0
      %672 = vmatprep.subr.mxu0 0.0
      %673 = vmatpush1.msra.mxu0 0.0
      %v674 = vand.u32 %v257, 4294901760
      %675 = vmatprep.subr.mxu0 %v674
      %v676 = vand.u32 %v256, 4294901760
      %677 = vmatpush1.msra.mxu0 %v676
      %v678 = vand.u32 %v255, 4294901760
      %679 = vmatprep.subr.mxu0 %v678
      %v680 = vand.u32 %v254, 4294901760
      %681 = vmatpush1.msra.mxu0 %v680
      %v682 = vand.u32 %v253, 4294901760
      %683 = vmatprep.subr.mxu0 %v682
      %v684 = vand.u32 %v252, 4294901760
      %685 = vmatpush1.msra.mxu0 %v684
      %v686 = vand.u32 %v251, 4294901760
      %687 = vmatprep.subr.mxu0 %v686
      %v688 = vand.u32 %v250, 4294901760
      %689 = vmatpush1.msra.mxu0 %v688
      %690 = vmatprep.subr.mxu0 0.0
      %691 = vmatpush2.msra.mxu0 0.0
      %692 = vmatprep.subr.mxu0 0.0
      %693 = vmatpush2.msra.mxu0 0.0
      %694 = vmatprep.subr.mxu0 0.0
      %695 = vmatpush2.msra.mxu0 0.0
      %696 = vmatprep.subr.mxu0 0.0
      %697 = vmatpush2.msra.mxu0 0.0
      %698 = vmatprep.subr.mxu0 0.0
      %699 = vmatpush2.msra.mxu0 0.0
      %700 = vmatprep.subr.mxu0 0.0
      %701 = vmatpush2.msra.mxu0 0.0
      %702 = vmatprep.subr.mxu0 0.0
      %703 = vmatpush2.msra.mxu0 0.0
      %704 = vmatprep.subr.mxu0 0.0
      %705 = vmatpush2.msra.mxu0 0.0
      %706 = vmatprep.subr.mxu0 0.0
      %707 = vmatpush2.msra.mxu0 0.0
      %708 = vmatprep.subr.mxu0 0.0
      %709 = vmatpush2.msra.mxu0 0.0
      %710 = vmatprep.subr.mxu0 0.0
      %711 = vmatpush2.msra.mxu0 0.0
      %712 = vmatprep.subr.mxu0 0.0
      %713 = vmatpush2.msra.mxu0 0.0
      %714 = vmatprep.subr.mxu0 0.0
      %715 = vmatpush2.msra.mxu0 0.0
      %716 = vmatprep.subr.mxu0 0.0
      %717 = vmatpush2.msra.mxu0 0.0
      %718 = vmatprep.subr.mxu0 0.0
      %719 = vmatpush2.msra.mxu0 0.0
      %720 = vmatprep.subr.mxu0 0.0
      %721 = vmatpush2.msra.mxu0 0.0
      %722 = vmatprep.mubr.f32.mxu0 0.0
      %v723 = vand.u32 %v276, 4294901760
      %v724 = vsub.f32 %v276, %v723
      %v725 = vand.u32 %v724, 4294901760
      %726 = vmatmul.mubr.f32.gmra.mxu0 %v725
      %v727 = vpop.f32.mrf.mxu0
      %v728 = vadd.f32 %v622, %v727
      %v729 = vpop.f32.mrf.mxu0
      %v730 = vadd.f32 %v624, %v729
      %731 = vmatprep.mubr.f32.mxu0 0.0
      %v732 = vand.u32 %v279, 4294901760
      %v733 = vsub.f32 %v279, %v732
      %v734 = vand.u32 %v733, 4294901760
      %735 = vmatmul.mubr.f32.gmra.mxu0 %v734
      %v736 = vpop.f32.mrf.mxu0
      %v737 = vadd.f32 %v630, %v736
      %v738 = vpop.f32.mrf.mxu0
      %v739 = vadd.f32 %v632, %v738
      %740 = vmatprep.mubr.f32.mxu0 0.0
      %v741 = vand.u32 %v282, 4294901760
      %v742 = vsub.f32 %v282, %v741
      %v743 = vand.u32 %v742, 4294901760
      %744 = vmatmul.mubr.f32.gmra.mxu0 %v743
      %v745 = vpop.f32.mrf.mxu0
      %v746 = vadd.f32 %v638, %v745
      %v747 = vpop.f32.mrf.mxu0
      %v748 = vadd.f32 %v640, %v747
      %749 = vmatprep.mubr.f32.mxu0 0.0
      %v750 = vand.u32 %v285, 4294901760
      %v751 = vsub.f32 %v285, %v750
      %v752 = vand.u32 %v751, 4294901760
      %753 = vmatmul.mubr.f32.gmra.mxu0 %v752
      %v754 = vpop.f32.mrf.mxu0
      %v755 = vadd.f32 %v646, %v754
      %v756 = vpop.f32.mrf.mxu0
      %v757 = vadd.f32 %v648, %v756
      %758 = vdwg.mxu0
      %759 = vmatprep.subr.mxu0 0.0
      %760 = vmatpush1.msra.mxu0 0.0
      %761 = vmatprep.subr.mxu0 0.0
      %762 = vmatpush1.msra.mxu0 0.0
      %763 = vmatprep.subr.mxu0 0.0
      %764 = vmatpush1.msra.mxu0 0.0
      %765 = vmatprep.subr.mxu0 0.0
      %766 = vmatpush1.msra.mxu0 0.0
      %767 = vmatprep.subr.mxu0 0.0
      %768 = vmatpush1.msra.mxu0 0.0
      %769 = vmatprep.subr.mxu0 0.0
      %770 = vmatpush1.msra.mxu0 0.0
      %771 = vmatprep.subr.mxu0 0.0
      %772 = vmatpush1.msra.mxu0 0.0
      %773 = vmatprep.subr.mxu0 0.0
      %774 = vmatpush1.msra.mxu0 0.0
      %775 = vmatprep.subr.mxu0 0.0
      %776 = vmatpush1.msra.mxu0 0.0
      %777 = vmatprep.subr.mxu0 0.0
      %778 = vmatpush1.msra.mxu0 0.0
      %779 = vmatprep.subr.mxu0 0.0
      %780 = vmatpush1.msra.mxu0 0.0
      %781 = vmatprep.subr.mxu0 0.0
      %782 = vmatpush1.msra.mxu0 0.0
      %v783 = vand.u32 %v257, 4294901760
      %v784 = vsub.f32 %v257, %v783
      %v785 = vand.u32 %v784, 4294901760
      %786 = vmatprep.subr.mxu0 %v785
      %v787 = vand.u32 %v256, 4294901760
      %v788 = vsub.f32 %v256, %v787
      %v789 = vand.u32 %v788, 4294901760
      %790 = vmatpush1.msra.mxu0 %v789
      %v791 = vand.u32 %v255, 4294901760
      %v792 = vsub.f32 %v255, %v791
      %v793 = vand.u32 %v792, 4294901760
      %794 = vmatprep.subr.mxu0 %v793
      %v795 = vand.u32 %v254, 4294901760
      %v796 = vsub.f32 %v254, %v795
      %v797 = vand.u32 %v796, 4294901760
      %798 = vmatpush1.msra.mxu0 %v797
      %v799 = vand.u32 %v253, 4294901760
      %v800 = vsub.f32 %v253, %v799
      %v801 = vand.u32 %v800, 4294901760
      %802 = vmatprep.subr.mxu0 %v801
      %v803 = vand.u32 %v252, 4294901760
      %v804 = vsub.f32 %v252, %v803
      %v805 = vand.u32 %v804, 4294901760
      %806 = vmatpush1.msra.mxu0 %v805
      %v807 = vand.u32 %v251, 4294901760
      %v808 = vsub.f32 %v251, %v807
      %v809 = vand.u32 %v808, 4294901760
      %810 = vmatprep.subr.mxu0 %v809
      %v811 = vand.u32 %v250, 4294901760
      %v812 = vsub.f32 %v250, %v811
      %v813 = vand.u32 %v812, 4294901760
      %814 = vmatpush1.msra.mxu0 %v813
      %815 = vmatprep.subr.mxu0 0.0
      %816 = vmatpush2.msra.mxu0 0.0
      %817 = vmatprep.subr.mxu0 0.0
      %818 = vmatpush2.msra.mxu0 0.0
      %819 = vmatprep.subr.mxu0 0.0
      %820 = vmatpush2.msra.mxu0 0.0
      %821 = vmatprep.subr.mxu0 0.0
      %822 = vmatpush2.msra.mxu0 0.0
      %823 = vmatprep.subr.mxu0 0.0
      %824 = vmatpush2.msra.mxu0 0.0
      %825 = vmatprep.subr.mxu0 0.0
      %826 = vmatpush2.msra.mxu0 0.0
      %827 = vmatprep.subr.mxu0 0.0
      %828 = vmatpush2.msra.mxu0 0.0
      %829 = vmatprep.subr.mxu0 0.0
      %830 = vmatpush2.msra.mxu0 0.0
      %831 = vmatprep.subr.mxu0 0.0
      %832 = vmatpush2.msra.mxu0 0.0
      %833 = vmatprep.subr.mxu0 0.0
      %834 = vmatpush2.msra.mxu0 0.0
      %835 = vmatprep.subr.mxu0 0.0
      %836 = vmatpush2.msra.mxu0 0.0
      %837 = vmatprep.subr.mxu0 0.0
      %838 = vmatpush2.msra.mxu0 0.0
      %839 = vmatprep.subr.mxu0 0.0
      %840 = vmatpush2.msra.mxu0 0.0
      %841 = vmatprep.subr.mxu0 0.0
      %842 = vmatpush2.msra.mxu0 0.0
      %843 = vmatprep.subr.mxu0 0.0
      %844 = vmatpush2.msra.mxu0 0.0
      %845 = vmatprep.subr.mxu0 0.0
      %846 = vmatpush2.msra.mxu0 0.0
      %847 = vmatprep.mubr.f32.mxu0 0.0
      %v848 = vand.u32 %v276, 4294901760
      %849 = vmatmul.mubr.f32.gmra.mxu0 %v848
      %v850 = vpop.f32.mrf.mxu0
      %v851 = vadd.f32 %v728, %v850
      %v852 = vpop.f32.mrf.mxu0
      %v853 = vadd.f32 %v730, %v852
      %854 = vmatprep.mubr.f32.mxu0 0.0
      %v855 = vand.u32 %v279, 4294901760
      %856 = vmatmul.mubr.f32.gmra.mxu0 %v855
      %v857 = vpop.f32.mrf.mxu0
      %v858 = vadd.f32 %v737, %v857
      %v859 = vpop.f32.mrf.mxu0
      %v860 = vadd.f32 %v739, %v859
      %861 = vmatprep.mubr.f32.mxu0 0.0
      %v862 = vand.u32 %v282, 4294901760
      %863 = vmatmul.mubr.f32.gmra.mxu0 %v862
      %v864 = vpop.f32.mrf.mxu0
      %v865 = vadd.f32 %v746, %v864
      %v866 = vpop.f32.mrf.mxu0
      %v867 = vadd.f32 %v748, %v866
      %868 = vmatprep.mubr.f32.mxu0 0.0
      %v869 = vand.u32 %v285, 4294901760
      %870 = vmatmul.mubr.f32.gmra.mxu0 %v869
      %v871 = vpop.f32.mrf.mxu0
      %v872 = vadd.f32 %v755, %v871
      %v873 = vpop.f32.mrf.mxu0
      %v874 = vadd.f32 %v757, %v873
      %875 = vdwg.mxu0
      %876 = vmatprep.subr.mxu0 0.0
      %877 = vmatpush1.msra.mxu0 0.0
      %878 = vmatprep.subr.mxu0 0.0
      %879 = vmatpush1.msra.mxu0 0.0
      %880 = vmatprep.subr.mxu0 0.0
      %881 = vmatpush1.msra.mxu0 0.0
      %882 = vmatprep.subr.mxu0 0.0
      %883 = vmatpush1.msra.mxu0 0.0
      %884 = vmatprep.subr.mxu0 0.0
      %885 = vmatpush1.msra.mxu0 0.0
      %886 = vmatprep.subr.mxu0 0.0
      %887 = vmatpush1.msra.mxu0 0.0
      %888 = vmatprep.subr.mxu0 0.0
      %889 = vmatpush1.msra.mxu0 0.0
      %890 = vmatprep.subr.mxu0 0.0
      %891 = vmatpush1.msra.mxu0 0.0
      %892 = vmatprep.subr.mxu0 0.0
      %893 = vmatpush1.msra.mxu0 0.0
      %894 = vmatprep.subr.mxu0 0.0
      %895 = vmatpush1.msra.mxu0 0.0
      %896 = vmatprep.subr.mxu0 0.0
      %897 = vmatpush1.msra.mxu0 0.0
      %898 = vmatprep.subr.mxu0 0.0
      %899 = vmatpush1.msra.mxu0 0.0
      %v900 = vand.u32 %v257, 4294901760
      %901 = vmatprep.subr.mxu0 %v900
      %v902 = vand.u32 %v256, 4294901760
      %903 = vmatpush1.msra.mxu0 %v902
      %v904 = vand.u32 %v255, 4294901760
      %905 = vmatprep.subr.mxu0 %v904
      %v906 = vand.u32 %v254, 4294901760
      %907 = vmatpush1.msra.mxu0 %v906
      %v908 = vand.u32 %v253, 4294901760
      %909 = vmatprep.subr.mxu0 %v908
      %v910 = vand.u32 %v252, 4294901760
      %911 = vmatpush1.msra.mxu0 %v910
      %v912 = vand.u32 %v251, 4294901760
      %913 = vmatprep.subr.mxu0 %v912
      %v914 = vand.u32 %v250, 4294901760
      %915 = vmatpush1.msra.mxu0 %v914
      %916 = vmatprep.subr.mxu0 0.0
      %917 = vmatpush2.msra.mxu0 0.0
      %918 = vmatprep.subr.mxu0 0.0
      %919 = vmatpush2.msra.mxu0 0.0
      %920 = vmatprep.subr.mxu0 0.0
      %921 = vmatpush2.msra.mxu0 0.0
      %922 = vmatprep.subr.mxu0 0.0
      %923 = vmatpush2.msra.mxu0 0.0
      %924 = vmatprep.subr.mxu0 0.0
      %925 = vmatpush2.msra.mxu0 0.0
      %926 = vmatprep.subr.mxu0 0.0
      %927 = vmatpush2.msra.mxu0 0.0
      %928 = vmatprep.subr.mxu0 0.0
      %929 = vmatpush2.msra.mxu0 0.0
      %930 = vmatprep.subr.mxu0 0.0
      %931 = vmatpush2.msra.mxu0 0.0
      %932 = vmatprep.subr.mxu0 0.0
      %933 = vmatpush2.msra.mxu0 0.0
      %934 = vmatprep.subr.mxu0 0.0
      %935 = vmatpush2.msra.mxu0 0.0
      %936 = vmatprep.subr.mxu0 0.0
      %937 = vmatpush2.msra.mxu0 0.0
      %938 = vmatprep.subr.mxu0 0.0
      %939 = vmatpush2.msra.mxu0 0.0
      %940 = vmatprep.subr.mxu0 0.0
      %941 = vmatpush2.msra.mxu0 0.0
      %942 = vmatprep.subr.mxu0 0.0
      %943 = vmatpush2.msra.mxu0 0.0
      %944 = vmatprep.subr.mxu0 0.0
      %945 = vmatpush2.msra.mxu0 0.0
      %946 = vmatprep.subr.mxu0 0.0
      %947 = vmatpush2.msra.mxu0 0.0
      %948 = vmatprep.mubr.f32.mxu0 0.0
      %v949 = vand.u32 %v276, 4294901760
      %950 = vmatmul.mubr.f32.gmra.mxu0 %v949
      %v951 = vpop.f32.mrf.mxu0
      %v952 = vadd.f32 %v851, %v951
      %v953 = vpop.f32.mrf.mxu0
      %v954 = vadd.f32 %v853, %v953
      %955 = vmatprep.mubr.f32.mxu0 0.0
      %v956 = vand.u32 %v279, 4294901760
      %957 = vmatmul.mubr.f32.gmra.mxu0 %v956
      %v958 = vpop.f32.mrf.mxu0
      %v959 = vadd.f32 %v858, %v958
      %v960 = vpop.f32.mrf.mxu0
      %v961 = vadd.f32 %v860, %v960
      %962 = vmatprep.mubr.f32.mxu0 0.0
      %v963 = vand.u32 %v282, 4294901760
      %964 = vmatmul.mubr.f32.gmra.mxu0 %v963
      %v965 = vpop.f32.mrf.mxu0
      %v966 = vadd.f32 %v865, %v965
      %v967 = vpop.f32.mrf.mxu0
      %v968 = vadd.f32 %v867, %v967
      %969 = vmatprep.mubr.f32.mxu0 0.0
      %v970 = vand.u32 %v285, 4294901760
      %971 = vmatmul.mubr.f32.gmra.mxu0 %v970
      %v972 = vpop.f32.mrf.mxu0
      %v973 = vadd.f32 %v872, %v972
      %v974 = vpop.f32.mrf.mxu0
      %v975 = vadd.f32 %v874, %v974
      %976 = vdwg.mxu0
      %v977 = vadd.f32 %v952, %v959
      %v978 = vadd.f32 %v977, %v966
      %v979 = vadd.f32 %v978, %v973
      %v980 = vrot.slane %v979, 4
      %v981 = vadd.f32 %v979, %v980
      %v982 = vrot.slane %v981, 2
      %v983 = vadd.f32 %v981, %v982
      %v984 = vrot.slane %v983, 1
      %v985 = vadd.f32 %v983, %v984
      %vm986 = vcmask 556032
      %v987 = vsel %vm986, %v954, 0.0
      %v988 = vsel %vm986, %v961, 0.0
      %v989 = vadd.f32 %v987, %v988
      %v990 = vsel %vm986, %v968, 0.0
      %v991 = vadd.f32 %v989, %v990
      %v992 = vsel %vm986, %v975, 0.0
      %v993 = vadd.f32 %v991, %v992
      %v994 = vrot.slane %v993, 4
      %v995 = vadd.f32 %v993, %v994
      %v996 = vrot.slane %v995, 2
      %v997 = vadd.f32 %v995, %v996
      %v998 = vrot.slane %v997, 1
      %v999 = vadd.f32 %v997, %v998
      %v1000 = vrcp.pop 32.0
      %v1001 = vmul.f32 %v985, %v1000
      %v1002 = vmul.f32 %v999, %v1000
      %v1003 = vsub.f32 %v952, %v1001
      %v1004 = vsub.f32 %v954, %v1002
      %v1005 = vsub.f32 %v959, %v1001
      %v1006 = vsub.f32 %v961, %v1002
      %v1007 = vsub.f32 %v966, %v1001
      %v1008 = vsub.f32 %v968, %v1002
      %v1009 = vsub.f32 %v973, %v1001
      %v1010 = vsub.f32 %v975, %v1002
      %v1011 = vmul.f32 %v1003, %v1003
      %v1012 = vmul.f32 %v1004, %v1004
      %v1013 = vmul.f32 %v1005, %v1005
      %v1014 = vmul.f32 %v1006, %v1006
      %v1015 = vmul.f32 %v1007, %v1007
      %v1016 = vmul.f32 %v1008, %v1008
      %v1017 = vmul.f32 %v1009, %v1009
      %v1018 = vmul.f32 %v1010, %v1010
      %v1019 = vadd.f32 %v1011, %v1013
      %v1020 = vadd.f32 %v1019, %v1015
      %v1021 = vadd.f32 %v1020, %v1017
      %v1022 = vrot.slane %v1021, 4
      %v1023 = vadd.f32 %v1021, %v1022
      %v1024 = vrot.slane %v1023, 2
      %v1025 = vadd.f32 %v1023, %v1024
      %v1026 = vrot.slane %v1025, 1
      %v1027 = vadd.f32 %v1025, %v1026
      %v1028 = vsel %vm986, %v1012, 0.0
      %v1029 = vsel %vm986, %v1014, 0.0
      %v1030 = vadd.f32 %v1028, %v1029
      %v1031 = vsel %vm986, %v1016, 0.0
      %v1032 = vadd.f32 %v1030, %v1031
      %v1033 = vsel %vm986, %v1018, 0.0
      %v1034 = vadd.f32 %v1032, %v1033
      %v1035 = vrot.slane %v1034, 4
      %v1036 = vadd.f32 %v1034, %v1035
      %v1037 = vrot.slane %v1036, 2
      %v1038 = vadd.f32 %v1036, %v1037
      %v1039 = vrot.slane %v1038, 1
      %v1040 = vadd.f32 %v1038, %v1039
      %v1041 = vmul.f32 %v1027, %v1000
      %v1042 = vmul.f32 %v1040, %v1000
      %v1043 = vadd.f32 %v1041, 1e-05
      %v1044 = vadd.f32 %v1042, 1e-05
      %v1045 = vrsqrt.pop %v1043
      %v1046 = vrsqrt.pop %v1044
      %v1047 = vmul.f32 %v1003, %v1045
      %v1048 = vmul.f32 %v1004, %v1046
      %v1049 = vmul.f32 %v1005, %v1045
      %v1050 = vmul.f32 %v1006, %v1046
      %v1051 = vmul.f32 %v1007, %v1045
      %v1052 = vmul.f32 %v1008, %v1046
      %v1053 = vmul.f32 %v1009, %v1045
      %v1054 = vmul.f32 %v1010, %v1046
      %1056 = vset.pattern.permute.xlu0 0
      %1057 = vperm.xlu0 %1056, %v258
      %v1058 = vpop.permute.xlu0 %1057
      %1061 = vset.pattern.permute.xlu0 0
      %1062 = vperm.xlu0 %1061, %v259
      %v1063 = vpop.permute.xlu0 %1062
      %1066 = vset.pattern.permute.xlu0 0
      %1067 = vperm.xlu0 %1066, %v260
      %v1068 = vpop.permute.xlu0 %1067
      %1071 = vset.pattern.permute.xlu0 0
      %1072 = vperm.xlu0 %1071, %v261
      %v1073 = vpop.permute.xlu0 %1072
      %v1075 = vmul.f32 %v1047, %v1058
      %v1076 = vmul.f32 %v1048, %v1058
      %v1077 = vmul.f32 %v1049, %v1063
      %v1078 = vmul.f32 %v1050, %v1063
      %v1079 = vmul.f32 %v1051, %v1068
      %v1080 = vmul.f32 %v1052, %v1068
      %v1081 = vmul.f32 %v1053, %v1073
      %v1082 = vmul.f32 %v1054, %v1073
      %1083 = vset.pattern.permute.xlu0 1
      %1084 = vperm.xlu0 %1083, %v258
      %v1085 = vpop.permute.xlu0 %1084
      %1087 = vset.pattern.permute.xlu0 1
      %1088 = vperm.xlu0 %1087, %v259
      %v1089 = vpop.permute.xlu0 %1088
      %1091 = vset.pattern.permute.xlu0 1
      %1092 = vperm.xlu0 %1091, %v260
      %v1093 = vpop.permute.xlu0 %1092
      %1095 = vset.pattern.permute.xlu0 1
      %1096 = vperm.xlu0 %1095, %v261
      %v1097 = vpop.permute.xlu0 %1096
      %v1099 = vadd.f32 %v1075, %v1085
      %v1100 = vadd.f32 %v1076, %v1085
      %v1101 = vadd.f32 %v1077, %v1089
      %v1102 = vadd.f32 %v1078, %v1089
      %v1103 = vadd.f32 %v1079, %v1093
      %v1104 = vadd.f32 %v1080, %v1093
      %v1105 = vadd.f32 %v1081, %v1097
      %v1106 = vadd.f32 %v1082, %v1097
      %v1107 = vmul.f32 %v1099, %v1099
      %v1108 = vmul.f32 %v1100, %v1100
      %v1109 = vmul.f32 %v1101, %v1101
      %v1110 = vmul.f32 %v1102, %v1102
      %v1111 = vmul.f32 %v1103, %v1103
      %v1112 = vmul.f32 %v1104, %v1104
      %v1113 = vmul.f32 %v1105, %v1105
      %v1114 = vmul.f32 %v1106, %v1106
      %v1115 = vmul.f32 %v1099, %v1107
      %v1116 = vmul.f32 %v1100, %v1108
      %v1117 = vmul.f32 %v1101, %v1109
      %v1118 = vmul.f32 %v1102, %v1110
      %v1119 = vmul.f32 %v1103, %v1111
      %v1120 = vmul.f32 %v1104, %v1112
      %v1121 = vmul.f32 %v1105, %v1113
      %v1122 = vmul.f32 %v1106, %v1114
      %v1123 = vmul.f32 %v1115, 0.044715
      %v1124 = vmul.f32 %v1116, 0.044715
      %v1125 = vmul.f32 %v1117, 0.044715
      %v1126 = vmul.f32 %v1118, 0.044715
      %v1127 = vmul.f32 %v1119, 0.044715
      %v1128 = vmul.f32 %v1120, 0.044715
      %v1129 = vmul.f32 %v1121, 0.044715
      %v1130 = vmul.f32 %v1122, 0.044715
      %v1131 = vadd.f32 %v1099, %v1123
      %v1132 = vadd.f32 %v1100, %v1124
      %v1133 = vadd.f32 %v1101, %v1125
      %v1134 = vadd.f32 %v1102, %v1126
      %v1135 = vadd.f32 %v1103, %v1127
      %v1136 = vadd.f32 %v1104, %v1128
      %v1137 = vadd.f32 %v1105, %v1129
      %v1138 = vadd.f32 %v1106, %v1130
      %v1139 = vmul.f32 %v1131, 0.7978846
      %v1140 = vmul.f32 %v1132, 0.7978846
      %v1141 = vmul.f32 %v1133, 0.7978846
      %v1142 = vmul.f32 %v1134, 0.7978846
      %v1143 = vmul.f32 %v1135, 0.7978846
      %v1144 = vmul.f32 %v1136, 0.7978846
      %v1145 = vmul.f32 %v1137, 0.7978846
      %v1146 = vmul.f32 %v1138, 0.7978846
      %v1147 = vtanh.pop %v1139
      %v1148 = vtanh.pop %v1140
      %v1149 = vtanh.pop %v1141
      %v1150 = vtanh.pop %v1142
      %v1151 = vtanh.pop %v1143
      %v1152 = vtanh.pop %v1144
      %v1153 = vtanh.pop %v1145
      %v1154 = vtanh.pop %v1146
      %v1155 = vadd.f32 %v1147, 1.0
      %v1156 = vadd.f32 %v1148, 1.0
      %v1157 = vadd.f32 %v1149, 1.0
      %v1158 = vadd.f32 %v1150, 1.0
      %v1159 = vadd.f32 %v1151, 1.0
      %v1160 = vadd.f32 %v1152, 1.0
      %v1161 = vadd.f32 %v1153, 1.0
      %v1162 = vadd.f32 %v1154, 1.0
      %v1163 = vmul.f32 %v1155, 0.5
      %v1164 = vmul.f32 %v1156, 0.5
      %v1165 = vmul.f32 %v1157, 0.5
      %v1166 = vmul.f32 %v1158, 0.5
      %v1167 = vmul.f32 %v1159, 0.5
      %v1168 = vmul.f32 %v1160, 0.5
      %v1169 = vmul.f32 %v1161, 0.5
      %v1170 = vmul.f32 %v1162, 0.5
      %v1171 = vmul.f32 %v1099, %v1163
      %v1172 = vmul.f32 %v1100, %v1164
      %v1173 = vmul.f32 %v1101, %v1165
      %v1174 = vmul.f32 %v1102, %v1166
      %v1175 = vmul.f32 %v1103, %v1167
      %v1176 = vmul.f32 %v1104, %v1168
      %v1177 = vmul.f32 %v1105, %v1169
      %v1178 = vmul.f32 %v1106, %v1170
      %v1179 = vld [vmem:[%s3] sm:$0xff]
      %v1180 = vld [vmem:[%s3 + $0x8] sm:$0xff]
      %1181 = vset.pattern.permute.xlu0 2
      %1182 = vperm.xlu0 %1181, %v258
      %v1183 = vpop.permute.xlu0 %1182
      %1185 = vset.pattern.permute.xlu0 2
      %1186 = vperm.xlu0 %1185, %v259
      %v1187 = vpop.permute.xlu0 %1186
      %v1190 = vsel %vm274, %v1179, 0
      %v1193 = vsel %vm274, %v1180, 0
      %1195 = vmatprep.subr.mxu0 0.0
      %1196 = vmatpush1.msra.mxu0 0.0
      %1197 = vmatprep.subr.mxu0 0.0
      %1198 = vmatpush1.msra.mxu0 0.0
      %1199 = vmatprep.subr.mxu0 0.0
      %1200 = vmatpush1.msra.mxu0 0.0
      %1201 = vmatprep.subr.mxu0 0.0
      %1202 = vmatpush1.msra.mxu0 0.0
      %1203 = vmatprep.subr.mxu0 0.0
      %1204 = vmatpush1.msra.mxu0 0.0
      %1205 = vmatprep.subr.mxu0 0.0
      %1206 = vmatpush1.msra.mxu0 0.0
      %1207 = vmatprep.subr.mxu0 0.0
      %1208 = vmatpush1.msra.mxu0 0.0
      %1209 = vmatprep.subr.mxu0 0.0
      %1210 = vmatpush1.msra.mxu0 0.0
      %1211 = vmatprep.subr.mxu0 0.0
      %1212 = vmatpush1.msra.mxu0 0.0
      %1213 = vmatprep.subr.mxu0 0.0
      %1214 = vmatpush1.msra.mxu0 0.0
      %1215 = vmatprep.subr.mxu0 0.0
      %1216 = vmatpush1.msra.mxu0 0.0
      %1217 = vmatprep.subr.mxu0 0.0
      %1218 = vmatpush1.msra.mxu0 0.0
      %v1219 = vand.u32 %v1178, 4294901760
      %1220 = vmatprep.subr.mxu0 %v1219
      %v1221 = vand.u32 %v1177, 4294901760
      %1222 = vmatpush1.msra.mxu0 %v1221
      %v1223 = vand.u32 %v1176, 4294901760
      %1224 = vmatprep.subr.mxu0 %v1223
      %v1225 = vand.u32 %v1175, 4294901760
      %1226 = vmatpush1.msra.mxu0 %v1225
      %v1227 = vand.u32 %v1174, 4294901760
      %1228 = vmatprep.subr.mxu0 %v1227
      %v1229 = vand.u32 %v1173, 4294901760
      %1230 = vmatpush1.msra.mxu0 %v1229
      %v1231 = vand.u32 %v1172, 4294901760
      %1232 = vmatprep.subr.mxu0 %v1231
      %v1233 = vand.u32 %v1171, 4294901760
      %1234 = vmatpush1.msra.mxu0 %v1233
      %1235 = vmatprep.subr.mxu0 0.0
      %1236 = vmatpush2.msra.mxu0 0.0
      %1237 = vmatprep.subr.mxu0 0.0
      %1238 = vmatpush2.msra.mxu0 0.0
      %1239 = vmatprep.subr.mxu0 0.0
      %1240 = vmatpush2.msra.mxu0 0.0
      %1241 = vmatprep.subr.mxu0 0.0
      %1242 = vmatpush2.msra.mxu0 0.0
      %1243 = vmatprep.subr.mxu0 0.0
      %1244 = vmatpush2.msra.mxu0 0.0
      %1245 = vmatprep.subr.mxu0 0.0
      %1246 = vmatpush2.msra.mxu0 0.0
      %1247 = vmatprep.subr.mxu0 0.0
      %1248 = vmatpush2.msra.mxu0 0.0
      %1249 = vmatprep.subr.mxu0 0.0
      %1250 = vmatpush2.msra.mxu0 0.0
      %1251 = vmatprep.subr.mxu0 0.0
      %1252 = vmatpush2.msra.mxu0 0.0
      %1253 = vmatprep.subr.mxu0 0.0
      %1254 = vmatpush2.msra.mxu0 0.0
      %1255 = vmatprep.subr.mxu0 0.0
      %1256 = vmatpush2.msra.mxu0 0.0
      %1257 = vmatprep.subr.mxu0 0.0
      %1258 = vmatpush2.msra.mxu0 0.0
      %1259 = vmatprep.subr.mxu0 0.0
      %1260 = vmatpush2.msra.mxu0 0.0
      %1261 = vmatprep.subr.mxu0 0.0
      %1262 = vmatpush2.msra.mxu0 0.0
      %1263 = vmatprep.subr.mxu0 0.0
      %1264 = vmatpush2.msra.mxu0 0.0
      %1265 = vmatprep.subr.mxu0 0.0
      %1266 = vmatpush2.msra.mxu0 0.0
      %1267 = vmatprep.mubr.f32.mxu0 0.0
      %v1268 = vand.u32 %v1190, 4294901760
      %v1269 = vsub.f32 %v1190, %v1268
      %v1270 = vand.u32 %v1269, 4294901760
      %v1271 = vsub.f32 %v1269, %v1270
      %v1272 = vand.u32 %v1271, 4294901760
      %1273 = vmatmul.mubr.f32.gmra.mxu0 %v1272
      %v1274 = vpop.f32.mrf.mxu0
      %v1275 = vadd.f32 %v1183, %v1274
      %v1276 = vpop.f32.mrf.mxu0
      %v1277 = vadd.f32 %v1183, %v1276
      %1278 = vmatprep.mubr.f32.mxu0 0.0
      %v1279 = vand.u32 %v1193, 4294901760
      %v1280 = vsub.f32 %v1193, %v1279
      %v1281 = vand.u32 %v1280, 4294901760
      %v1282 = vsub.f32 %v1280, %v1281
      %v1283 = vand.u32 %v1282, 4294901760
      %1284 = vmatmul.mubr.f32.gmra.mxu0 %v1283
      %v1285 = vpop.f32.mrf.mxu0
      %v1286 = vadd.f32 %v1187, %v1285
      %v1287 = vpop.f32.mrf.mxu0
      %v1288 = vadd.f32 %v1187, %v1287
      %1289 = vdwg.mxu0
      %1290 = vmatprep.subr.mxu0 0.0
      %1291 = vmatpush1.msra.mxu0 0.0
      %1292 = vmatprep.subr.mxu0 0.0
      %1293 = vmatpush1.msra.mxu0 0.0
      %1294 = vmatprep.subr.mxu0 0.0
      %1295 = vmatpush1.msra.mxu0 0.0
      %1296 = vmatprep.subr.mxu0 0.0
      %1297 = vmatpush1.msra.mxu0 0.0
      %1298 = vmatprep.subr.mxu0 0.0
      %1299 = vmatpush1.msra.mxu0 0.0
      %1300 = vmatprep.subr.mxu0 0.0
      %1301 = vmatpush1.msra.mxu0 0.0
      %1302 = vmatprep.subr.mxu0 0.0
      %1303 = vmatpush1.msra.mxu0 0.0
      %1304 = vmatprep.subr.mxu0 0.0
      %1305 = vmatpush1.msra.mxu0 0.0
      %1306 = vmatprep.subr.mxu0 0.0
      %1307 = vmatpush1.msra.mxu0 0.0
      %1308 = vmatprep.subr.mxu0 0.0
      %1309 = vmatpush1.msra.mxu0 0.0
      %1310 = vmatprep.subr.mxu0 0.0
      %1311 = vmatpush1.msra.mxu0 0.0
      %1312 = vmatprep.subr.mxu0 0.0
      %1313 = vmatpush1.msra.mxu0 0.0
      %v1314 = vand.u32 %v1178, 4294901760
      %v1315 = vsub.f32 %v1178, %v1314
      %v1316 = vand.u32 %v1315, 4294901760
      %v1317 = vsub.f32 %v1315, %v1316
      %v1318 = vand.u32 %v1317, 4294901760
      %1319 = vmatprep.subr.mxu0 %v1318
      %v1320 = vand.u32 %v1177, 4294901760
      %v1321 = vsub.f32 %v1177, %v1320
      %v1322 = vand.u32 %v1321, 4294901760
      %v1323 = vsub.f32 %v1321, %v1322
      %v1324 = vand.u32 %v1323, 4294901760
      %1325 = vmatpush1.msra.mxu0 %v1324
      %v1326 = vand.u32 %v1176, 4294901760
      %v1327 = vsub.f32 %v1176, %v1326
      %v1328 = vand.u32 %v1327, 4294901760
      %v1329 = vsub.f32 %v1327, %v1328
      %v1330 = vand.u32 %v1329, 4294901760
      %1331 = vmatprep.subr.mxu0 %v1330
      %v1332 = vand.u32 %v1175, 4294901760
      %v1333 = vsub.f32 %v1175, %v1332
      %v1334 = vand.u32 %v1333, 4294901760
      %v1335 = vsub.f32 %v1333, %v1334
      %v1336 = vand.u32 %v1335, 4294901760
      %1337 = vmatpush1.msra.mxu0 %v1336
      %v1338 = vand.u32 %v1174, 4294901760
      %v1339 = vsub.f32 %v1174, %v1338
      %v1340 = vand.u32 %v1339, 4294901760
      %v1341 = vsub.f32 %v1339, %v1340
      %v1342 = vand.u32 %v1341, 4294901760
      %1343 = vmatprep.subr.mxu0 %v1342
      %v1344 = vand.u32 %v1173, 4294901760
      %v1345 = vsub.f32 %v1173, %v1344
      %v1346 = vand.u32 %v1345, 4294901760
      %v1347 = vsub.f32 %v1345, %v1346
      %v1348 = vand.u32 %v1347, 4294901760
      %1349 = vmatpush1.msra.mxu0 %v1348
      %v1350 = vand.u32 %v1172, 4294901760
      %v1351 = vsub.f32 %v1172, %v1350
      %v1352 = vand.u32 %v1351, 4294901760
      %v1353 = vsub.f32 %v1351, %v1352
      %v1354 = vand.u32 %v1353, 4294901760
      %1355 = vmatprep.subr.mxu0 %v1354
      %v1356 = vand.u32 %v1171, 4294901760
      %v1357 = vsub.f32 %v1171, %v1356
      %v1358 = vand.u32 %v1357, 4294901760
      %v1359 = vsub.f32 %v1357, %v1358
      %v1360 = vand.u32 %v1359, 4294901760
      %1361 = vmatpush1.msra.mxu0 %v1360
      %1362 = vmatprep.subr.mxu0 0.0
      %1363 = vmatpush2.msra.mxu0 0.0
      %1364 = vmatprep.subr.mxu0 0.0
      %1365 = vmatpush2.msra.mxu0 0.0
      %1366 = vmatprep.subr.mxu0 0.0
      %1367 = vmatpush2.msra.mxu0 0.0
      %1368 = vmatprep.subr.mxu0 0.0
      %1369 = vmatpush2.msra.mxu0 0.0
      %1370 = vmatprep.subr.mxu0 0.0
      %1371 = vmatpush2.msra.mxu0 0.0
      %1372 = vmatprep.subr.mxu0 0.0
      %1373 = vmatpush2.msra.mxu0 0.0
      %1374 = vmatprep.subr.mxu0 0.0
      %1375 = vmatpush2.msra.mxu0 0.0
      %1376 = vmatprep.subr.mxu0 0.0
      %1377 = vmatpush2.msra.mxu0 0.0
      %1378 = vmatprep.subr.mxu0 0.0
      %1379 = vmatpush2.msra.mxu0 0.0
      %1380 = vmatprep.subr.mxu0 0.0
      %1381 = vmatpush2.msra.mxu0 0.0
      %1382 = vmatprep.subr.mxu0 0.0
      %1383 = vmatpush2.msra.mxu0 0.0
      %1384 = vmatprep.subr.mxu0 0.0
      %1385 = vmatpush2.msra.mxu0 0.0
      %1386 = vmatprep.subr.mxu0 0.0
      %1387 = vmatpush2.msra.mxu0 0.0
      %1388 = vmatprep.subr.mxu0 0.0
      %1389 = vmatpush2.msra.mxu0 0.0
      %1390 = vmatprep.subr.mxu0 0.0
      %1391 = vmatpush2.msra.mxu0 0.0
      %1392 = vmatprep.subr.mxu0 0.0
      %1393 = vmatpush2.msra.mxu0 0.0
      %1394 = vmatprep.mubr.f32.mxu0 0.0
      %v1395 = vand.u32 %v1190, 4294901760
      %1396 = vmatmul.mubr.f32.gmra.mxu0 %v1395
      %v1397 = vpop.f32.mrf.mxu0
      %v1398 = vadd.f32 %v1275, %v1397
      %v1399 = vpop.f32.mrf.mxu0
      %v1400 = vadd.f32 %v1277, %v1399
      %1401 = vmatprep.mubr.f32.mxu0 0.0
      %v1402 = vand.u32 %v1193, 4294901760
      %1403 = vmatmul.mubr.f32.gmra.mxu0 %v1402
      %v1404 = vpop.f32.mrf.mxu0
      %v1405 = vadd.f32 %v1286, %v1404
      %v1406 = vpop.f32.mrf.mxu0
      %v1407 = vadd.f32 %v1288, %v1406
      %1408 = vdwg.mxu0
      %1409 = vmatprep.subr.mxu0 0.0
      %1410 = vmatpush1.msra.mxu0 0.0
      %1411 = vmatprep.subr.mxu0 0.0
      %1412 = vmatpush1.msra.mxu0 0.0
      %1413 = vmatprep.subr.mxu0 0.0
      %1414 = vmatpush1.msra.mxu0 0.0
      %1415 = vmatprep.subr.mxu0 0.0
      %1416 = vmatpush1.msra.mxu0 0.0
      %1417 = vmatprep.subr.mxu0 0.0
      %1418 = vmatpush1.msra.mxu0 0.0
      %1419 = vmatprep.subr.mxu0 0.0
      %1420 = vmatpush1.msra.mxu0 0.0
      %1421 = vmatprep.subr.mxu0 0.0
      %1422 = vmatpush1.msra.mxu0 0.0
      %1423 = vmatprep.subr.mxu0 0.0
      %1424 = vmatpush1.msra.mxu0 0.0
      %1425 = vmatprep.subr.mxu0 0.0
      %1426 = vmatpush1.msra.mxu0 0.0
      %1427 = vmatprep.subr.mxu0 0.0
      %1428 = vmatpush1.msra.mxu0 0.0
      %1429 = vmatprep.subr.mxu0 0.0
      %1430 = vmatpush1.msra.mxu0 0.0
      %1431 = vmatprep.subr.mxu0 0.0
      %1432 = vmatpush1.msra.mxu0 0.0
      %v1433 = vand.u32 %v1178, 4294901760
      %v1434 = vsub.f32 %v1178, %v1433
      %1435 = vmatprep.subr.mxu0 %v1434
      %v1436 = vand.u32 %v1177, 4294901760
      %v1437 = vsub.f32 %v1177, %v1436
      %1438 = vmatpush1.msra.mxu0 %v1437
      %v1439 = vand.u32 %v1176, 4294901760
      %v1440 = vsub.f32 %v1176, %v1439
      %1441 = vmatprep.subr.mxu0 %v1440
      %v1442 = vand.u32 %v1175, 4294901760
      %v1443 = vsub.f32 %v1175, %v1442
      %1444 = vmatpush1.msra.mxu0 %v1443
      %v1445 = vand.u32 %v1174, 4294901760
      %v1446 = vsub.f32 %v1174, %v1445
      %1447 = vmatprep.subr.mxu0 %v1446
      %v1448 = vand.u32 %v1173, 4294901760
      %v1449 = vsub.f32 %v1173, %v1448
      %1450 = vmatpush1.msra.mxu0 %v1449
      %v1451 = vand.u32 %v1172, 4294901760
      %v1452 = vsub.f32 %v1172, %v1451
      %1453 = vmatprep.subr.mxu0 %v1452
      %v1454 = vand.u32 %v1171, 4294901760
      %v1455 = vsub.f32 %v1171, %v1454
      %1456 = vmatpush1.msra.mxu0 %v1455
      %1457 = vmatprep.subr.mxu0 0.0
      %1458 = vmatpush2.msra.mxu0 0.0
      %1459 = vmatprep.subr.mxu0 0.0
      %1460 = vmatpush2.msra.mxu0 0.0
      %1461 = vmatprep.subr.mxu0 0.0
      %1462 = vmatpush2.msra.mxu0 0.0
      %1463 = vmatprep.subr.mxu0 0.0
      %1464 = vmatpush2.msra.mxu0 0.0
      %1465 = vmatprep.subr.mxu0 0.0
      %1466 = vmatpush2.msra.mxu0 0.0
      %1467 = vmatprep.subr.mxu0 0.0
      %1468 = vmatpush2.msra.mxu0 0.0
      %1469 = vmatprep.subr.mxu0 0.0
      %1470 = vmatpush2.msra.mxu0 0.0
      %1471 = vmatprep.subr.mxu0 0.0
      %1472 = vmatpush2.msra.mxu0 0.0
      %1473 = vmatprep.subr.mxu0 0.0
      %1474 = vmatpush2.msra.mxu0 0.0
      %1475 = vmatprep.subr.mxu0 0.0
      %1476 = vmatpush2.msra.mxu0 0.0
      %1477 = vmatprep.subr.mxu0 0.0
      %1478 = vmatpush2.msra.mxu0 0.0
      %1479 = vmatprep.subr.mxu0 0.0
      %1480 = vmatpush2.msra.mxu0 0.0
      %1481 = vmatprep.subr.mxu0 0.0
      %1482 = vmatpush2.msra.mxu0 0.0
      %1483 = vmatprep.subr.mxu0 0.0
      %1484 = vmatpush2.msra.mxu0 0.0
      %1485 = vmatprep.subr.mxu0 0.0
      %1486 = vmatpush2.msra.mxu0 0.0
      %1487 = vmatprep.subr.mxu0 0.0
      %1488 = vmatpush2.msra.mxu0 0.0
      %1489 = vmatprep.mubr.f32.mxu0 0.0
      %v1490 = vand.u32 %v1190, 4294901760
      %v1491 = vsub.f32 %v1190, %v1490
      %1492 = vmatmul.mubr.f32.gmra.mxu0 %v1491
      %v1493 = vpop.f32.mrf.mxu0
      %v1494 = vadd.f32 %v1398, %v1493
      %v1495 = vpop.f32.mrf.mxu0
      %v1496 = vadd.f32 %v1400, %v1495
      %1497 = vmatprep.mubr.f32.mxu0 0.0
      %v1498 = vand.u32 %v1193, 4294901760
      %v1499 = vsub.f32 %v1193, %v1498
      %1500 = vmatmul.mubr.f32.gmra.mxu0 %v1499
      %v1501 = vpop.f32.mrf.mxu0
      %v1502 = vadd.f32 %v1405, %v1501
      %v1503 = vpop.f32.mrf.mxu0
      %v1504 = vadd.f32 %v1407, %v1503
      %1505 = vdwg.mxu0
      %1506 = vmatprep.subr.mxu0 0.0
      %1507 = vmatpush1.msra.mxu0 0.0
      %1508 = vmatprep.subr.mxu0 0.0
      %1509 = vmatpush1.msra.mxu0 0.0
      %1510 = vmatprep.subr.mxu0 0.0
      %1511 = vmatpush1.msra.mxu0 0.0
      %1512 = vmatprep.subr.mxu0 0.0
      %1513 = vmatpush1.msra.mxu0 0.0
      %1514 = vmatprep.subr.mxu0 0.0
      %1515 = vmatpush1.msra.mxu0 0.0
      %1516 = vmatprep.subr.mxu0 0.0
      %1517 = vmatpush1.msra.mxu0 0.0
      %1518 = vmatprep.subr.mxu0 0.0
      %1519 = vmatpush1.msra.mxu0 0.0
      %1520 = vmatprep.subr.mxu0 0.0
      %1521 = vmatpush1.msra.mxu0 0.0
      %1522 = vmatprep.subr.mxu0 0.0
      %1523 = vmatpush1.msra.mxu0 0.0
      %1524 = vmatprep.subr.mxu0 0.0
      %1525 = vmatpush1.msra.mxu0 0.0
      %1526 = vmatprep.subr.mxu0 0.0
      %1527 = vmatpush1.msra.mxu0 0.0
      %1528 = vmatprep.subr.mxu0 0.0
      %1529 = vmatpush1.msra.mxu0 0.0
      %v1530 = vand.u32 %v1178, 4294901760
      %1531 = vmatprep.subr.mxu0 %v1530
      %v1532 = vand.u32 %v1177, 4294901760
      %1533 = vmatpush1.msra.mxu0 %v1532
      %v1534 = vand.u32 %v1176, 4294901760
      %1535 = vmatprep.subr.mxu0 %v1534
      %v1536 = vand.u32 %v1175, 4294901760
      %1537 = vmatpush1.msra.mxu0 %v1536
      %v1538 = vand.u32 %v1174, 4294901760
      %1539 = vmatprep.subr.mxu0 %v1538
      %v1540 = vand.u32 %v1173, 4294901760
      %1541 = vmatpush1.msra.mxu0 %v1540
      %v1542 = vand.u32 %v1172, 4294901760
      %1543 = vmatprep.subr.mxu0 %v1542
      %v1544 = vand.u32 %v1171, 4294901760
      %1545 = vmatpush1.msra.mxu0 %v1544
      %1546 = vmatprep.subr.mxu0 0.0
      %1547 = vmatpush2.msra.mxu0 0.0
      %1548 = vmatprep.subr.mxu0 0.0
      %1549 = vmatpush2.msra.mxu0 0.0
      %1550 = vmatprep.subr.mxu0 0.0
      %1551 = vmatpush2.msra.mxu0 0.0
      %1552 = vmatprep.subr.mxu0 0.0
      %1553 = vmatpush2.msra.mxu0 0.0
      %1554 = vmatprep.subr.mxu0 0.0
      %1555 = vmatpush2.msra.mxu0 0.0
      %1556 = vmatprep.subr.mxu0 0.0
      %1557 = vmatpush2.msra.mxu0 0.0
      %1558 = vmatprep.subr.mxu0 0.0
      %1559 = vmatpush2.msra.mxu0 0.0
      %1560 = vmatprep.subr.mxu0 0.0
      %1561 = vmatpush2.msra.mxu0 0.0
      %1562 = vmatprep.subr.mxu0 0.0
      %1563 = vmatpush2.msra.mxu0 0.0
      %1564 = vmatprep.subr.mxu0 0.0
      %1565 = vmatpush2.msra.mxu0 0.0
      %1566 = vmatprep.subr.mxu0 0.0
      %1567 = vmatpush2.msra.mxu0 0.0
      %1568 = vmatprep.subr.mxu0 0.0
      %1569 = vmatpush2.msra.mxu0 0.0
      %1570 = vmatprep.subr.mxu0 0.0
      %1571 = vmatpush2.msra.mxu0 0.0
      %1572 = vmatprep.subr.mxu0 0.0
      %1573 = vmatpush2.msra.mxu0 0.0
      %1574 = vmatprep.subr.mxu0 0.0
      %1575 = vmatpush2.msra.mxu0 0.0
      %1576 = vmatprep.subr.mxu0 0.0
      %1577 = vmatpush2.msra.mxu0 0.0
      %1578 = vmatprep.mubr.f32.mxu0 0.0
      %v1579 = vand.u32 %v1190, 4294901760
      %v1580 = vsub.f32 %v1190, %v1579
      %v1581 = vand.u32 %v1580, 4294901760
      %1582 = vmatmul.mubr.f32.gmra.mxu0 %v1581
      %v1583 = vpop.f32.mrf.mxu0
      %v1584 = vadd.f32 %v1494, %v1583
      %v1585 = vpop.f32.mrf.mxu0
      %v1586 = vadd.f32 %v1496, %v1585
      %1587 = vmatprep.mubr.f32.mxu0 0.0
      %v1588 = vand.u32 %v1193, 4294901760
      %v1589 = vsub.f32 %v1193, %v1588
      %v1590 = vand.u32 %v1589, 4294901760
      %1591 = vmatmul.mubr.f32.gmra.mxu0 %v1590
      %v1592 = vpop.f32.mrf.mxu0
      %v1593 = vadd.f32 %v1502, %v1592
      %v1594 = vpop.f32.mrf.mxu0
      %v1595 = vadd.f32 %v1504, %v1594
      %1596 = vdwg.mxu0
      %1597 = vmatprep.subr.mxu0 0.0
      %1598 = vmatpush1.msra.mxu0 0.0
      %1599 = vmatprep.subr.mxu0 0.0
      %1600 = vmatpush1.msra.mxu0 0.0
      %1601 = vmatprep.subr.mxu0 0.0
      %1602 = vmatpush1.msra.mxu0 0.0
      %1603 = vmatprep.subr.mxu0 0.0
      %1604 = vmatpush1.msra.mxu0 0.0
      %1605 = vmatprep.subr.mxu0 0.0
      %1606 = vmatpush1.msra.mxu0 0.0
      %1607 = vmatprep.subr.mxu0 0.0
      %1608 = vmatpush1.msra.mxu0 0.0
      %1609 = vmatprep.subr.mxu0 0.0
      %1610 = vmatpush1.msra.mxu0 0.0
      %1611 = vmatprep.subr.mxu0 0.0
      %1612 = vmatpush1.msra.mxu0 0.0
      %1613 = vmatprep.subr.mxu0 0.0
      %1614 = vmatpush1.msra.mxu0 0.0
      %1615 = vmatprep.subr.mxu0 0.0
      %1616 = vmatpush1.msra.mxu0 0.0
      %1617 = vmatprep.subr.mxu0 0.0
      %1618 = vmatpush1.msra.mxu0 0.0
      %1619 = vmatprep.subr.mxu0 0.0
      %1620 = vmatpush1.msra.mxu0 0.0
      %v1621 = vand.u32 %v1178, 4294901760
      %v1622 = vsub.f32 %v1178, %v1621
      %v1623 = vand.u32 %v1622, 4294901760
      %1624 = vmatprep.subr.mxu0 %v1623
      %v1625 = vand.u32 %v1177, 4294901760
      %v1626 = vsub.f32 %v1177, %v1625
      %v1627 = vand.u32 %v1626, 4294901760
      %1628 = vmatpush1.msra.mxu0 %v1627
      %v1629 = vand.u32 %v1176, 4294901760
      %v1630 = vsub.f32 %v1176, %v1629
      %v1631 = vand.u32 %v1630, 4294901760
      %1632 = vmatprep.subr.mxu0 %v1631
      %v1633 = vand.u32 %v1175, 4294901760
      %v1634 = vsub.f32 %v1175, %v1633
      %v1635 = vand.u32 %v1634, 4294901760
      %1636 = vmatpush1.msra.mxu0 %v1635
      %v1637 = vand.u32 %v1174, 4294901760
      %v1638 = vsub.f32 %v1174, %v1637
      %v1639 = vand.u32 %v1638, 4294901760
      %1640 = vmatprep.subr.mxu0 %v1639
      %v1641 = vand.u32 %v1173, 4294901760
      %v1642 = vsub.f32 %v1173, %v1641
      %v1643 = vand.u32 %v1642, 4294901760
      %1644 = vmatpush1.msra.mxu0 %v1643
      %v1645 = vand.u32 %v1172, 4294901760
      %v1646 = vsub.f32 %v1172, %v1645
      %v1647 = vand.u32 %v1646, 4294901760
      %1648 = vmatprep.subr.mxu0 %v1647
      %v1649 = vand.u32 %v1171, 4294901760
      %v1650 = vsub.f32 %v1171, %v1649
      %v1651 = vand.u32 %v1650, 4294901760
      %1652 = vmatpush1.msra.mxu0 %v1651
      %1653 = vmatprep.subr.mxu0 0.0
      %1654 = vmatpush2.msra.mxu0 0.0
      %1655 = vmatprep.subr.mxu0 0.0
      %1656 = vmatpush2.msra.mxu0 0.0
      %1657 = vmatprep.subr.mxu0 0.0
      %1658 = vmatpush2.msra.mxu0 0.0
      %1659 = vmatprep.subr.mxu0 0.0
      %1660 = vmatpush2.msra.mxu0 0.0
      %1661 = vmatprep.subr.mxu0 0.0
      %1662 = vmatpush2.msra.mxu0 0.0
      %1663 = vmatprep.subr.mxu0 0.0
      %1664 = vmatpush2.msra.mxu0 0.0
      %1665 = vmatprep.subr.mxu0 0.0
      %1666 = vmatpush2.msra.mxu0 0.0
      %1667 = vmatprep.subr.mxu0 0.0
      %1668 = vmatpush2.msra.mxu0 0.0
      %1669 = vmatprep.subr.mxu0 0.0
      %1670 = vmatpush2.msra.mxu0 0.0
      %1671 = vmatprep.subr.mxu0 0.0
      %1672 = vmatpush2.msra.mxu0 0.0
      %1673 = vmatprep.subr.mxu0 0.0
      %1674 = vmatpush2.msra.mxu0 0.0
      %1675 = vmatprep.subr.mxu0 0.0
      %1676 = vmatpush2.msra.mxu0 0.0
      %1677 = vmatprep.subr.mxu0 0.0
      %1678 = vmatpush2.msra.mxu0 0.0
      %1679 = vmatprep.subr.mxu0 0.0
      %1680 = vmatpush2.msra.mxu0 0.0
      %1681 = vmatprep.subr.mxu0 0.0
      %1682 = vmatpush2.msra.mxu0 0.0
      %1683 = vmatprep.subr.mxu0 0.0
      %1684 = vmatpush2.msra.mxu0 0.0
      %1685 = vmatprep.mubr.f32.mxu0 0.0
      %v1686 = vand.u32 %v1190, 4294901760
      %1687 = vmatmul.mubr.f32.gmra.mxu0 %v1686
      %v1688 = vpop.f32.mrf.mxu0
      %v1689 = vadd.f32 %v1584, %v1688
      %v1690 = vpop.f32.mrf.mxu0
      %v1691 = vadd.f32 %v1586, %v1690
      %1692 = vmatprep.mubr.f32.mxu0 0.0
      %v1693 = vand.u32 %v1193, 4294901760
      %1694 = vmatmul.mubr.f32.gmra.mxu0 %v1693
      %v1695 = vpop.f32.mrf.mxu0
      %v1696 = vadd.f32 %v1593, %v1695
      %v1697 = vpop.f32.mrf.mxu0
      %v1698 = vadd.f32 %v1595, %v1697
      %1699 = vdwg.mxu0
      %1700 = vmatprep.subr.mxu0 0.0
      %1701 = vmatpush1.msra.mxu0 0.0
      %1702 = vmatprep.subr.mxu0 0.0
      %1703 = vmatpush1.msra.mxu0 0.0
      %1704 = vmatprep.subr.mxu0 0.0
      %1705 = vmatpush1.msra.mxu0 0.0
      %1706 = vmatprep.subr.mxu0 0.0
      %1707 = vmatpush1.msra.mxu0 0.0
      %1708 = vmatprep.subr.mxu0 0.0
      %1709 = vmatpush1.msra.mxu0 0.0
      %1710 = vmatprep.subr.mxu0 0.0
      %1711 = vmatpush1.msra.mxu0 0.0
      %1712 = vmatprep.subr.mxu0 0.0
      %1713 = vmatpush1.msra.mxu0 0.0
      %1714 = vmatprep.subr.mxu0 0.0
      %1715 = vmatpush1.msra.mxu0 0.0
      %1716 = vmatprep.subr.mxu0 0.0
      %1717 = vmatpush1.msra.mxu0 0.0
      %1718 = vmatprep.subr.mxu0 0.0
      %1719 = vmatpush1.msra.mxu0 0.0
      %1720 = vmatprep.subr.mxu0 0.0
      %1721 = vmatpush1.msra.mxu0 0.0
      %1722 = vmatprep.subr.mxu0 0.0
      %1723 = vmatpush1.msra.mxu0 0.0
      %v1724 = vand.u32 %v1178, 4294901760
      %1725 = vmatprep.subr.mxu0 %v1724
      %v1726 = vand.u32 %v1177, 4294901760
      %1727 = vmatpush1.msra.mxu0 %v1726
      %v1728 = vand.u32 %v1176, 4294901760
      %1729 = vmatprep.subr.mxu0 %v1728
      %v1730 = vand.u32 %v1175, 4294901760
      %1731 = vmatpush1.msra.mxu0 %v1730
      %v1732 = vand.u32 %v1174, 4294901760
      %1733 = vmatprep.subr.mxu0 %v1732
      %v1734 = vand.u32 %v1173, 4294901760
      %1735 = vmatpush1.msra.mxu0 %v1734
      %v1736 = vand.u32 %v1172, 4294901760
      %1737 = vmatprep.subr.mxu0 %v1736
      %v1738 = vand.u32 %v1171, 4294901760
      %1739 = vmatpush1.msra.mxu0 %v1738
      %1740 = vmatprep.subr.mxu0 0.0
      %1741 = vmatpush2.msra.mxu0 0.0
      %1742 = vmatprep.subr.mxu0 0.0
      %1743 = vmatpush2.msra.mxu0 0.0
      %1744 = vmatprep.subr.mxu0 0.0
      %1745 = vmatpush2.msra.mxu0 0.0
      %1746 = vmatprep.subr.mxu0 0.0
      %1747 = vmatpush2.msra.mxu0 0.0
      %1748 = vmatprep.subr.mxu0 0.0
      %1749 = vmatpush2.msra.mxu0 0.0
      %1750 = vmatprep.subr.mxu0 0.0
      %1751 = vmatpush2.msra.mxu0 0.0
      %1752 = vmatprep.subr.mxu0 0.0
      %1753 = vmatpush2.msra.mxu0 0.0
      %1754 = vmatprep.subr.mxu0 0.0
      %1755 = vmatpush2.msra.mxu0 0.0
      %1756 = vmatprep.subr.mxu0 0.0
      %1757 = vmatpush2.msra.mxu0 0.0
      %1758 = vmatprep.subr.mxu0 0.0
      %1759 = vmatpush2.msra.mxu0 0.0
      %1760 = vmatprep.subr.mxu0 0.0
      %1761 = vmatpush2.msra.mxu0 0.0
      %1762 = vmatprep.subr.mxu0 0.0
      %1763 = vmatpush2.msra.mxu0 0.0
      %1764 = vmatprep.subr.mxu0 0.0
      %1765 = vmatpush2.msra.mxu0 0.0
      %1766 = vmatprep.subr.mxu0 0.0
      %1767 = vmatpush2.msra.mxu0 0.0
      %1768 = vmatprep.subr.mxu0 0.0
      %1769 = vmatpush2.msra.mxu0 0.0
      %1770 = vmatprep.subr.mxu0 0.0
      %1771 = vmatpush2.msra.mxu0 0.0
      %1772 = vmatprep.mubr.f32.mxu0 0.0
      %v1773 = vand.u32 %v1190, 4294901760
      %1774 = vmatmul.mubr.f32.gmra.mxu0 %v1773
      %v1775 = vpop.f32.mrf.mxu0
      %v1776 = vadd.f32 %v1689, %v1775
      %v1777 = vpop.f32.mrf.mxu0
      %v1778 = vadd.f32 %v1691, %v1777
      %1779 = vmatprep.mubr.f32.mxu0 0.0
      %v1780 = vand.u32 %v1193, 4294901760
      %1781 = vmatmul.mubr.f32.gmra.mxu0 %v1780
      %v1782 = vpop.f32.mrf.mxu0
      %v1783 = vadd.f32 %v1696, %v1782
      %v1784 = vpop.f32.mrf.mxu0
      %v1785 = vadd.f32 %v1698, %v1784
      %1786 = vdwg.mxu0
      %v1787 = vadd.f32 %v1776, %v1783
      %v1788 = vrot.slane %v1787, 4
      %v1789 = vadd.f32 %v1787, %v1788
      %v1790 = vrot.slane %v1789, 2
      %v1791 = vadd.f32 %v1789, %v1790
      %v1792 = vrot.slane %v1791, 1
      %v1793 = vadd.f32 %v1791, %v1792
      %v1794 = vsel %vm986, %v1778, 0.0
      %v1795 = vsel %vm986, %v1785, 0.0
      %v1796 = vadd.f32 %v1794, %v1795
      %v1797 = vrot.slane %v1796, 4
      %v1798 = vadd.f32 %v1796, %v1797
      %v1799 = vrot.slane %v1798, 2
      %v1800 = vadd.f32 %v1798, %v1799
      %v1801 = vrot.slane %v1800, 1
      %v1802 = vadd.f32 %v1800, %v1801
      %v1803 = vrcp.pop 16.0
      %v1804 = vmul.f32 %v1793, %v1803
      %v1805 = vmul.f32 %v1802, %v1803
      %v1806 = vsub.f32 %v1776, %v1804
      %v1807 = vsub.f32 %v1778, %v1805
      %v1808 = vsub.f32 %v1783, %v1804
      %v1809 = vsub.f32 %v1785, %v1805
      %v1810 = vmul.f32 %v1806, %v1806
      %v1811 = vmul.f32 %v1807, %v1807
      %v1812 = vmul.f32 %v1808, %v1808
      %v1813 = vmul.f32 %v1809, %v1809
      %v1814 = vadd.f32 %v1810, %v1812
      %v1815 = vrot.slane %v1814, 4
      %v1816 = vadd.f32 %v1814, %v1815
      %v1817 = vrot.slane %v1816, 2
      %v1818 = vadd.f32 %v1816, %v1817
      %v1819 = vrot.slane %v1818, 1
      %v1820 = vadd.f32 %v1818, %v1819
      %v1821 = vsel %vm986, %v1811, 0.0
      %v1822 = vsel %vm986, %v1813, 0.0
      %v1823 = vadd.f32 %v1821, %v1822
      %v1824 = vrot.slane %v1823, 4
      %v1825 = vadd.f32 %v1823, %v1824
      %v1826 = vrot.slane %v1825, 2
      %v1827 = vadd.f32 %v1825, %v1826
      %v1828 = vrot.slane %v1827, 1
      %v1829 = vadd.f32 %v1827, %v1828
      %v1830 = vmul.f32 %v1820, %v1803
      %v1831 = vmul.f32 %v1829, %v1803
      %v1832 = vadd.f32 %v1830, 1e-05
      %v1833 = vadd.f32 %v1831, 1e-05
      %v1834 = vrsqrt.pop %v1832
      %v1835 = vrsqrt.pop %v1833
      %v1836 = vmul.f32 %v1806, %v1834
      %v1837 = vmul.f32 %v1807, %v1835
      %v1838 = vmul.f32 %v1808, %v1834
      %v1839 = vmul.f32 %v1809, %v1835
      %1840 = vset.pattern.permute.xlu0 3
      %1841 = vperm.xlu0 %1840, %v258
      %v1842 = vpop.permute.xlu0 %1841
      %1844 = vset.pattern.permute.xlu0 3
      %1845 = vperm.xlu0 %1844, %v259
      %v1846 = vpop.permute.xlu0 %1845
      %v1848 = vmul.f32 %v1836, %v1842
      %v1849 = vmul.f32 %v1837, %v1842
      %v1850 = vmul.f32 %v1838, %v1846
      %v1851 = vmul.f32 %v1839, %v1846
      %1852 = vset.pattern.permute.xlu0 4
      %1853 = vperm.xlu0 %1852, %v258
      %v1854 = vpop.permute.xlu0 %1853
      %1856 = vset.pattern.permute.xlu0 4
      %1857 = vperm.xlu0 %1856, %v259
      %v1858 = vpop.permute.xlu0 %1857
      %v1860 = vadd.f32 %v1848, %v1854
      %v1861 = vadd.f32 %v1849, %v1854
      %v1862 = vadd.f32 %v1850, %v1858
      %v1863 = vadd.f32 %v1851, %v1858
      %v1864 = vmul.f32 %v1860, %v1860
      %v1865 = vmul.f32 %v1861, %v1861
      %v1866 = vmul.f32 %v1862, %v1862
      %v1867 = vmul.f32 %v1863, %v1863
      %v1868 = vmul.f32 %v1860, %v1864
      %v1869 = vmul.f32 %v1861, %v1865
      %v1870 = vmul.f32 %v1862, %v1866
      %v1871 = vmul.f32 %v1863, %v1867
      %v1872 = vmul.f32 %v1868, 0.044715
      %v1873 = vmul.f32 %v1869, 0.044715
      %v1874 = vmul.f32 %v1870, 0.044715
      %v1875 = vmul.f32 %v1871, 0.044715
      %v1876 = vadd.f32 %v1860, %v1872
      %v1877 = vadd.f32 %v1861, %v1873
      %v1878 = vadd.f32 %v1862, %v1874
      %v1879 = vadd.f32 %v1863, %v1875
      %v1880 = vmul.f32 %v1876, 0.7978846
      %v1881 = vmul.f32 %v1877, 0.7978846
      %v1882 = vmul.f32 %v1878, 0.7978846
      %v1883 = vmul.f32 %v1879, 0.7978846
      %v1884 = vtanh.pop %v1880
      %v1885 = vtanh.pop %v1881
      %v1886 = vtanh.pop %v1882
      %v1887 = vtanh.pop %v1883
      %v1888 = vadd.f32 %v1884, 1.0
      %v1889 = vadd.f32 %v1885, 1.0
      %v1890 = vadd.f32 %v1886, 1.0
      %v1891 = vadd.f32 %v1887, 1.0
      %v1892 = vmul.f32 %v1888, 0.5
      %v1893 = vmul.f32 %v1889, 0.5
      %v1894 = vmul.f32 %v1890, 0.5
      %v1895 = vmul.f32 %v1891, 0.5
      %v1896 = vmul.f32 %v1860, %v1892
      %v1897 = vmul.f32 %v1861, %v1893
      %v1898 = vmul.f32 %v1862, %v1894
      %v1899 = vmul.f32 %v1863, %v1895
      %v1900 = vld [vmem:[%s4] sm:$0xff]
      %1901 = vset.pattern.permute.xlu0 5
      %1902 = vperm.xlu0 %1901, %v258
      %v1903 = vpop.permute.xlu0 %1902
      %vm1905 = vcmask 130048
      %v1907 = vsel %vm1905, %v1900, 0
      %1909 = vmatprep.subr.mxu0 0.0
      %1910 = vmatpush1.msra.mxu0 0.0
      %1911 = vmatprep.subr.mxu0 0.0
      %1912 = vmatpush1.msra.mxu0 0.0
      %1913 = vmatprep.subr.mxu0 0.0
      %1914 = vmatpush1.msra.mxu0 0.0
      %1915 = vmatprep.subr.mxu0 0.0
      %1916 = vmatpush1.msra.mxu0 0.0
      %1917 = vmatprep.subr.mxu0 0.0
      %1918 = vmatpush1.msra.mxu0 0.0
      %1919 = vmatprep.subr.mxu0 0.0
      %1920 = vmatpush1.msra.mxu0 0.0
      %1921 = vmatprep.subr.mxu0 0.0
      %1922 = vmatpush1.msra.mxu0 0.0
      %1923 = vmatprep.subr.mxu0 0.0
      %1924 = vmatpush1.msra.mxu0 0.0
      %1925 = vmatprep.subr.mxu0 0.0
      %1926 = vmatpush1.msra.mxu0 0.0
      %1927 = vmatprep.subr.mxu0 0.0
      %1928 = vmatpush1.msra.mxu0 0.0
      %1929 = vmatprep.subr.mxu0 0.0
      %1930 = vmatpush1.msra.mxu0 0.0
      %1931 = vmatprep.subr.mxu0 0.0
      %1932 = vmatpush1.msra.mxu0 0.0
      %1933 = vmatprep.subr.mxu0 0.0
      %1934 = vmatpush1.msra.mxu0 0.0
      %1935 = vmatprep.subr.mxu0 0.0
      %1936 = vmatpush1.msra.mxu0 0.0
      %v1937 = vand.u32 %v1899, 4294901760
      %1938 = vmatprep.subr.mxu0 %v1937
      %v1939 = vand.u32 %v1898, 4294901760
      %1940 = vmatpush1.msra.mxu0 %v1939
      %v1941 = vand.u32 %v1897, 4294901760
      %1942 = vmatprep.subr.mxu0 %v1941
      %v1943 = vand.u32 %v1896, 4294901760
      %1944 = vmatpush1.msra.mxu0 %v1943
      %1945 = vmatprep.subr.mxu0 0.0
      %1946 = vmatpush2.msra.mxu0 0.0
      %1947 = vmatprep.subr.mxu0 0.0
      %1948 = vmatpush2.msra.mxu0 0.0
      %1949 = vmatprep.subr.mxu0 0.0
      %1950 = vmatpush2.msra.mxu0 0.0
      %1951 = vmatprep.subr.mxu0 0.0
      %1952 = vmatpush2.msra.mxu0 0.0
      %1953 = vmatprep.subr.mxu0 0.0
      %1954 = vmatpush2.msra.mxu0 0.0
      %1955 = vmatprep.subr.mxu0 0.0
      %1956 = vmatpush2.msra.mxu0 0.0
      %1957 = vmatprep.subr.mxu0 0.0
      %1958 = vmatpush2.msra.mxu0 0.0
      %1959 = vmatprep.subr.mxu0 0.0
      %1960 = vmatpush2.msra.mxu0 0.0
      %1961 = vmatprep.subr.mxu0 0.0
      %1962 = vmatpush2.msra.mxu0 0.0
      %1963 = vmatprep.subr.mxu0 0.0
      %1964 = vmatpush2.msra.mxu0 0.0
      %1965 = vmatprep.subr.mxu0 0.0
      %1966 = vmatpush2.msra.mxu0 0.0
      %1967 = vmatprep.subr.mxu0 0.0
      %1968 = vmatpush2.msra.mxu0 0.0
      %1969 = vmatprep.subr.mxu0 0.0
      %1970 = vmatpush2.msra.mxu0 0.0
      %1971 = vmatprep.subr.mxu0 0.0
      %1972 = vmatpush2.msra.mxu0 0.0
      %1973 = vmatprep.subr.mxu0 0.0
      %1974 = vmatpush2.msra.mxu0 0.0
      %1975 = vmatprep.subr.mxu0 0.0
      %1976 = vmatpush2.msra.mxu0 0.0
      %1977 = vmatprep.mubr.f32.mxu0 0.0
      %v1978 = vand.u32 %v1907, 4294901760
      %v1979 = vsub.f32 %v1907, %v1978
      %v1980 = vand.u32 %v1979, 4294901760
      %v1981 = vsub.f32 %v1979, %v1980
      %v1982 = vand.u32 %v1981, 4294901760
      %1983 = vmatmul.mubr.f32.gmra.mxu0 %v1982
      %v1984 = vpop.f32.mrf.mxu0
      %v1985 = vadd.f32 %v1903, %v1984
      %v1986 = vpop.f32.mrf.mxu0
      %v1987 = vadd.f32 %v1903, %v1986
      %1988 = vdwg.mxu0
      %1989 = vmatprep.subr.mxu0 0.0
      %1990 = vmatpush1.msra.mxu0 0.0
      %1991 = vmatprep.subr.mxu0 0.0
      %1992 = vmatpush1.msra.mxu0 0.0
      %1993 = vmatprep.subr.mxu0 0.0
      %1994 = vmatpush1.msra.mxu0 0.0
      %1995 = vmatprep.subr.mxu0 0.0
      %1996 = vmatpush1.msra.mxu0 0.0
      %1997 = vmatprep.subr.mxu0 0.0
      %1998 = vmatpush1.msra.mxu0 0.0
      %1999 = vmatprep.subr.mxu0 0.0
      %2000 = vmatpush1.msra.mxu0 0.0
      %2001 = vmatprep.subr.mxu0 0.0
      %2002 = vmatpush1.msra.mxu0 0.0
      %2003 = vmatprep.subr.mxu0 0.0
      %2004 = vmatpush1.msra.mxu0 0.0
      %2005 = vmatprep.subr.mxu0 0.0
      %2006 = vmatpush1.msra.mxu0 0.0
      %2007 = vmatprep.subr.mxu0 0.0
      %2008 = vmatpush1.msra.mxu0 0.0
      %2009 = vmatprep.subr.mxu0 0.0
      %2010 = vmatpush1.msra.mxu0 0.0
      %2011 = vmatprep.subr.mxu0 0.0
      %2012 = vmatpush1.msra.mxu0 0.0
      %2013 = vmatprep.subr.mxu0 0.0
      %2014 = vmatpush1.msra.mxu0 0.0
      %2015 = vmatprep.subr.mxu0 0.0
      %2016 = vmatpush1.msra.mxu0 0.0
      %v2017 = vand.u32 %v1899, 4294901760
      %v2018 = vsub.f32 %v1899, %v2017
      %v2019 = vand.u32 %v2018, 4294901760
      %v2020 = vsub.f32 %v2018, %v2019
      %v2021 = vand.u32 %v2020, 4294901760
      %2022 = vmatprep.subr.mxu0 %v2021
      %v2023 = vand.u32 %v1898, 4294901760
      %v2024 = vsub.f32 %v1898, %v2023
      %v2025 = vand.u32 %v2024, 4294901760
      %v2026 = vsub.f32 %v2024, %v2025
      %v2027 = vand.u32 %v2026, 4294901760
      %2028 = vmatpush1.msra.mxu0 %v2027
      %v2029 = vand.u32 %v1897, 4294901760
      %v2030 = vsub.f32 %v1897, %v2029
      %v2031 = vand.u32 %v2030, 4294901760
      %v2032 = vsub.f32 %v2030, %v2031
      %v2033 = vand.u32 %v2032, 4294901760
      %2034 = vmatprep.subr.mxu0 %v2033
      %v2035 = vand.u32 %v1896, 4294901760
      %v2036 = vsub.f32 %v1896, %v2035
      %v2037 = vand.u32 %v2036, 4294901760
      %v2038 = vsub.f32 %v2036, %v2037
      %v2039 = vand.u32 %v2038, 4294901760
      %2040 = vmatpush1.msra.mxu0 %v2039
      %2041 = vmatprep.subr.mxu0 0.0
      %2042 = vmatpush2.msra.mxu0 0.0
      %2043 = vmatprep.subr.mxu0 0.0
      %2044 = vmatpush2.msra.mxu0 0.0
      %2045 = vmatprep.subr.mxu0 0.0
      %2046 = vmatpush2.msra.mxu0 0.0
      %2047 = vmatprep.subr.mxu0 0.0
      %2048 = vmatpush2.msra.mxu0 0.0
      %2049 = vmatprep.subr.mxu0 0.0
      %2050 = vmatpush2.msra.mxu0 0.0
      %2051 = vmatprep.subr.mxu0 0.0
      %2052 = vmatpush2.msra.mxu0 0.0
      %2053 = vmatprep.subr.mxu0 0.0
      %2054 = vmatpush2.msra.mxu0 0.0
      %2055 = vmatprep.subr.mxu0 0.0
      %2056 = vmatpush2.msra.mxu0 0.0
      %2057 = vmatprep.subr.mxu0 0.0
      %2058 = vmatpush2.msra.mxu0 0.0
      %2059 = vmatprep.subr.mxu0 0.0
      %2060 = vmatpush2.msra.mxu0 0.0
      %2061 = vmatprep.subr.mxu0 0.0
      %2062 = vmatpush2.msra.mxu0 0.0
      %2063 = vmatprep.subr.mxu0 0.0
      %2064 = vmatpush2.msra.mxu0 0.0
      %2065 = vmatprep.subr.mxu0 0.0
      %2066 = vmatpush2.msra.mxu0 0.0
      %2067 = vmatprep.subr.mxu0 0.0
      %2068 = vmatpush2.msra.mxu0 0.0
      %2069 = vmatprep.subr.mxu0 0.0
      %2070 = vmatpush2.msra.mxu0 0.0
      %2071 = vmatprep.subr.mxu0 0.0
      %2072 = vmatpush2.msra.mxu0 0.0
      %2073 = vmatprep.mubr.f32.mxu0 0.0
      %v2074 = vand.u32 %v1907, 4294901760
      %2075 = vmatmul.mubr.f32.gmra.mxu0 %v2074
      %v2076 = vpop.f32.mrf.mxu0
      %v2077 = vadd.f32 %v1985, %v2076
      %v2078 = vpop.f32.mrf.mxu0
      %v2079 = vadd.f32 %v1987, %v2078
      %2080 = vdwg.mxu0
      %2081 = vmatprep.subr.mxu0 0.0
      %2082 = vmatpush1.msra.mxu0 0.0
      %2083 = vmatprep.subr.mxu0 0.0
      %2084 = vmatpush1.msra.mxu0 0.0
      %2085 = vmatprep.subr.mxu0 0.0
      %2086 = vmatpush1.msra.mxu0 0.0
      %2087 = vmatprep.subr.mxu0 0.0
      %2088 = vmatpush1.msra.mxu0 0.0
      %2089 = vmatprep.subr.mxu0 0.0
      %2090 = vmatpush1.msra.mxu0 0.0
      %2091 = vmatprep.subr.mxu0 0.0
      %2092 = vmatpush1.msra.mxu0 0.0
      %2093 = vmatprep.subr.mxu0 0.0
      %2094 = vmatpush1.msra.mxu0 0.0
      %2095 = vmatprep.subr.mxu0 0.0
      %2096 = vmatpush1.msra.mxu0 0.0
      %2097 = vmatprep.subr.mxu0 0.0
      %2098 = vmatpush1.msra.mxu0 0.0
      %2099 = vmatprep.subr.mxu0 0.0
      %2100 = vmatpush1.msra.mxu0 0.0
      %2101 = vmatprep.subr.mxu0 0.0
      %2102 = vmatpush1.msra.mxu0 0.0
      %2103 = vmatprep.subr.mxu0 0.0
      %2104 = vmatpush1.msra.mxu0 0.0
      %2105 = vmatprep.subr.mxu0 0.0
      %2106 = vmatpush1.msra.mxu0 0.0
      %2107 = vmatprep.subr.mxu0 0.0
      %2108 = vmatpush1.msra.mxu0 0.0
      %v2109 = vand.u32 %v1899, 4294901760
      %v2110 = vsub.f32 %v1899, %v2109
      %2111 = vmatprep.subr.mxu0 %v2110
      %v2112 = vand.u32 %v1898, 4294901760
      %v2113 = vsub.f32 %v1898, %v2112
      %2114 = vmatpush1.msra.mxu0 %v2113
      %v2115 = vand.u32 %v1897, 4294901760
      %v2116 = vsub.f32 %v1897, %v2115
      %2117 = vmatprep.subr.mxu0 %v2116
      %v2118 = vand.u32 %v1896, 4294901760
      %v2119 = vsub.f32 %v1896, %v2118
      %2120 = vmatpush1.msra.mxu0 %v2119
      %2121 = vmatprep.subr.mxu0 0.0
      %2122 = vmatpush2.msra.mxu0 0.0
      %2123 = vmatprep.subr.mxu0 0.0
      %2124 = vmatpush2.msra.mxu0 0.0
      %2125 = vmatprep.subr.mxu0 0.0
      %2126 = vmatpush2.msra.mxu0 0.0
      %2127 = vmatprep.subr.mxu0 0.0
      %2128 = vmatpush2.msra.mxu0 0.0
      %2129 = vmatprep.subr.mxu0 0.0
      %2130 = vmatpush2.msra.mxu0 0.0
      %2131 = vmatprep.subr.mxu0 0.0
      %2132 = vmatpush2.msra.mxu0 0.0
      %2133 = vmatprep.subr.mxu0 0.0
      %2134 = vmatpush2.msra.mxu0 0.0
      %2135 = vmatprep.subr.mxu0 0.0
      %2136 = vmatpush2.msra.mxu0 0.0
      %2137 = vmatprep.subr.mxu0 0.0
      %2138 = vmatpush2.msra.mxu0 0.0
      %2139 = vmatprep.subr.mxu0 0.0
      %2140 = vmatpush2.msra.mxu0 0.0
      %2141 = vmatprep.subr.mxu0 0.0
      %2142 = vmatpush2.msra.mxu0 0.0
      %2143 = vmatprep.subr.mxu0 0.0
      %2144 = vmatpush2.msra.mxu0 0.0
      %2145 = vmatprep.subr.mxu0 0.0
      %2146 = vmatpush2.msra.mxu0 0.0
      %2147 = vmatprep.subr.mxu0 0.0
      %2148 = vmatpush2.msra.mxu0 0.0
      %2149 = vmatprep.subr.mxu0 0.0
      %2150 = vmatpush2.msra.mxu0 0.0
      %2151 = vmatprep.subr.mxu0 0.0
      %2152 = vmatpush2.msra.mxu0 0.0
      %2153 = vmatprep.mubr.f32.mxu0 0.0
      %v2154 = vand.u32 %v1907, 4294901760
      %v2155 = vsub.f32 %v1907, %v2154
      %2156 = vmatmul.mubr.f32.gmra.mxu0 %v2155
      %v2157 = vpop.f32.mrf.mxu0
      %v2158 = vadd.f32 %v2077, %v2157
      %v2159 = vpop.f32.mrf.mxu0
      %v2160 = vadd.f32 %v2079, %v2159
      %2161 = vdwg.mxu0
      %2162 = vmatprep.subr.mxu0 0.0
      %2163 = vmatpush1.msra.mxu0 0.0
      %2164 = vmatprep.subr.mxu0 0.0
      %2165 = vmatpush1.msra.mxu0 0.0
      %2166 = vmatprep.subr.mxu0 0.0
      %2167 = vmatpush1.msra.mxu0 0.0
      %2168 = vmatprep.subr.mxu0 0.0
      %2169 = vmatpush1.msra.mxu0 0.0
      %2170 = vmatprep.subr.mxu0 0.0
      %2171 = vmatpush1.msra.mxu0 0.0
      %2172 = vmatprep.subr.mxu0 0.0
      %2173 = vmatpush1.msra.mxu0 0.0
      %2174 = vmatprep.subr.mxu0 0.0
      %2175 = vmatpush1.msra.mxu0 0.0
      %2176 = vmatprep.subr.mxu0 0.0
      %2177 = vmatpush1.msra.mxu0 0.0
      %2178 = vmatprep.subr.mxu0 0.0
      %2179 = vmatpush1.msra.mxu0 0.0
      %2180 = vmatprep.subr.mxu0 0.0
      %2181 = vmatpush1.msra.mxu0 0.0
      %2182 = vmatprep.subr.mxu0 0.0
      %2183 = vmatpush1.msra.mxu0 0.0
      %2184 = vmatprep.subr.mxu0 0.0
      %2185 = vmatpush1.msra.mxu0 0.0
      %2186 = vmatprep.subr.mxu0 0.0
      %2187 = vmatpush1.msra.mxu0 0.0
      %2188 = vmatprep.subr.mxu0 0.0
      %2189 = vmatpush1.msra.mxu0 0.0
      %v2190 = vand.u32 %v1899, 4294901760
      %2191 = vmatprep.subr.mxu0 %v2190
      %v2192 = vand.u32 %v1898, 4294901760
      %2193 = vmatpush1.msra.mxu0 %v2192
      %v2194 = vand.u32 %v1897, 4294901760
      %2195 = vmatprep.subr.mxu0 %v2194
      %v2196 = vand.u32 %v1896, 4294901760
      %2197 = vmatpush1.msra.mxu0 %v2196
      %2198 = vmatprep.subr.mxu0 0.0
      %2199 = vmatpush2.msra.mxu0 0.0
      %2200 = vmatprep.subr.mxu0 0.0
      %2201 = vmatpush2.msra.mxu0 0.0
      %2202 = vmatprep.subr.mxu0 0.0
      %2203 = vmatpush2.msra.mxu0 0.0
      %2204 = vmatprep.subr.mxu0 0.0
      %2205 = vmatpush2.msra.mxu0 0.0
      %2206 = vmatprep.subr.mxu0 0.0
      %2207 = vmatpush2.msra.mxu0 0.0
      %2208 = vmatprep.subr.mxu0 0.0
      %2209 = vmatpush2.msra.mxu0 0.0
      %2210 = vmatprep.subr.mxu0 0.0
      %2211 = vmatpush2.msra.mxu0 0.0
      %2212 = vmatprep.subr.mxu0 0.0
      %2213 = vmatpush2.msra.mxu0 0.0
      %2214 = vmatprep.subr.mxu0 0.0
      %2215 = vmatpush2.msra.mxu0 0.0
      %2216 = vmatprep.subr.mxu0 0.0
      %2217 = vmatpush2.msra.mxu0 0.0
      %2218 = vmatprep.subr.mxu0 0.0
      %2219 = vmatpush2.msra.mxu0 0.0
      %2220 = vmatprep.subr.mxu0 0.0
      %2221 = vmatpush2.msra.mxu0 0.0
      %2222 = vmatprep.subr.mxu0 0.0
      %2223 = vmatpush2.msra.mxu0 0.0
      %2224 = vmatprep.subr.mxu0 0.0
      %2225 = vmatpush2.msra.mxu0 0.0
      %2226 = vmatprep.subr.mxu0 0.0
      %2227 = vmatpush2.msra.mxu0 0.0
      %2228 = vmatprep.subr.mxu0 0.0
      %2229 = vmatpush2.msra.mxu0 0.0
      %2230 = vmatprep.mubr.f32.mxu0 0.0
      %v2231 = vand.u32 %v1907, 4294901760
      %v2232 = vsub.f32 %v1907, %v2231
      %v2233 = vand.u32 %v2232, 4294901760
      %2234 = vmatmul.mubr.f32.gmra.mxu0 %v2233
      %v2235 = vpop.f32.mrf.mxu0
      %v2236 = vadd.f32 %v2158, %v2235
      %v2237 = vpop.f32.mrf.mxu0
      %v2238 = vadd.f32 %v2160, %v2237
      %2239 = vdwg.mxu0
      %2240 = vmatprep.subr.mxu0 0.0
      %2241 = vmatpush1.msra.mxu0 0.0
      %2242 = vmatprep.subr.mxu0 0.0
      %2243 = vmatpush1.msra.mxu0 0.0
      %2244 = vmatprep.subr.mxu0 0.0
      %2245 = vmatpush1.msra.mxu0 0.0
      %2246 = vmatprep.subr.mxu0 0.0
      %2247 = vmatpush1.msra.mxu0 0.0
      %2248 = vmatprep.subr.mxu0 0.0
      %2249 = vmatpush1.msra.mxu0 0.0
      %2250 = vmatprep.subr.mxu0 0.0
      %2251 = vmatpush1.msra.mxu0 0.0
      %2252 = vmatprep.subr.mxu0 0.0
      %2253 = vmatpush1.msra.mxu0 0.0
      %2254 = vmatprep.subr.mxu0 0.0
      %2255 = vmatpush1.msra.mxu0 0.0
      %2256 = vmatprep.subr.mxu0 0.0
      %2257 = vmatpush1.msra.mxu0 0.0
      %2258 = vmatprep.subr.mxu0 0.0
      %2259 = vmatpush1.msra.mxu0 0.0
      %2260 = vmatprep.subr.mxu0 0.0
      %2261 = vmatpush1.msra.mxu0 0.0
      %2262 = vmatprep.subr.mxu0 0.0
      %2263 = vmatpush1.msra.mxu0 0.0
      %2264 = vmatprep.subr.mxu0 0.0
      %2265 = vmatpush1.msra.mxu0 0.0
      %2266 = vmatprep.subr.mxu0 0.0
      %2267 = vmatpush1.msra.mxu0 0.0
      %v2268 = vand.u32 %v1899, 4294901760
      %v2269 = vsub.f32 %v1899, %v2268
      %v2270 = vand.u32 %v2269, 4294901760
      %2271 = vmatprep.subr.mxu0 %v2270
      %v2272 = vand.u32 %v1898, 4294901760
      %v2273 = vsub.f32 %v1898, %v2272
      %v2274 = vand.u32 %v2273, 4294901760
      %2275 = vmatpush1.msra.mxu0 %v2274
      %v2276 = vand.u32 %v1897, 4294901760
      %v2277 = vsub.f32 %v1897, %v2276
      %v2278 = vand.u32 %v2277, 4294901760
      %2279 = vmatprep.subr.mxu0 %v2278
      %v2280 = vand.u32 %v1896, 4294901760
      %v2281 = vsub.f32 %v1896, %v2280
      %v2282 = vand.u32 %v2281, 4294901760
      %2283 = vmatpush1.msra.mxu0 %v2282
      %2284 = vmatprep.subr.mxu0 0.0
      %2285 = vmatpush2.msra.mxu0 0.0
      %2286 = vmatprep.subr.mxu0 0.0
      %2287 = vmatpush2.msra.mxu0 0.0
      %2288 = vmatprep.subr.mxu0 0.0
      %2289 = vmatpush2.msra.mxu0 0.0
      %2290 = vmatprep.subr.mxu0 0.0
      %2291 = vmatpush2.msra.mxu0 0.0
      %2292 = vmatprep.subr.mxu0 0.0
      %2293 = vmatpush2.msra.mxu0 0.0
      %2294 = vmatprep.subr.mxu0 0.0
      %2295 = vmatpush2.msra.mxu0 0.0
      %2296 = vmatprep.subr.mxu0 0.0
      %2297 = vmatpush2.msra.mxu0 0.0
      %2298 = vmatprep.subr.mxu0 0.0
      %2299 = vmatpush2.msra.mxu0 0.0
      %2300 = vmatprep.subr.mxu0 0.0
      %2301 = vmatpush2.msra.mxu0 0.0
      %2302 = vmatprep.subr.mxu0 0.0
      %2303 = vmatpush2.msra.mxu0 0.0
      %2304 = vmatprep.subr.mxu0 0.0
      %2305 = vmatpush2.msra.mxu0 0.0
      %2306 = vmatprep.subr.mxu0 0.0
      %2307 = vmatpush2.msra.mxu0 0.0
      %2308 = vmatprep.subr.mxu0 0.0
      %2309 = vmatpush2.msra.mxu0 0.0
      %2310 = vmatprep.subr.mxu0 0.0
      %2311 = vmatpush2.msra.mxu0 0.0
      %2312 = vmatprep.subr.mxu0 0.0
      %2313 = vmatpush2.msra.mxu0 0.0
      %2314 = vmatprep.subr.mxu0 0.0
      %2315 = vmatpush2.msra.mxu0 0.0
      %2316 = vmatprep.mubr.f32.mxu0 0.0
      %v2317 = vand.u32 %v1907, 4294901760
      %2318 = vmatmul.mubr.f32.gmra.mxu0 %v2317
      %v2319 = vpop.f32.mrf.mxu0
      %v2320 = vadd.f32 %v2236, %v2319
      %v2321 = vpop.f32.mrf.mxu0
      %v2322 = vadd.f32 %v2238, %v2321
      %2323 = vdwg.mxu0
      %2324 = vmatprep.subr.mxu0 0.0
      %2325 = vmatpush1.msra.mxu0 0.0
      %2326 = vmatprep.subr.mxu0 0.0
      %2327 = vmatpush1.msra.mxu0 0.0
      %2328 = vmatprep.subr.mxu0 0.0
      %2329 = vmatpush1.msra.mxu0 0.0
      %2330 = vmatprep.subr.mxu0 0.0
      %2331 = vmatpush1.msra.mxu0 0.0
      %2332 = vmatprep.subr.mxu0 0.0
      %2333 = vmatpush1.msra.mxu0 0.0
      %2334 = vmatprep.subr.mxu0 0.0
      %2335 = vmatpush1.msra.mxu0 0.0
      %2336 = vmatprep.subr.mxu0 0.0
      %2337 = vmatpush1.msra.mxu0 0.0
      %2338 = vmatprep.subr.mxu0 0.0
      %2339 = vmatpush1.msra.mxu0 0.0
      %2340 = vmatprep.subr.mxu0 0.0
      %2341 = vmatpush1.msra.mxu0 0.0
      %2342 = vmatprep.subr.mxu0 0.0
      %2343 = vmatpush1.msra.mxu0 0.0
      %2344 = vmatprep.subr.mxu0 0.0
      %2345 = vmatpush1.msra.mxu0 0.0
      %2346 = vmatprep.subr.mxu0 0.0
      %2347 = vmatpush1.msra.mxu0 0.0
      %2348 = vmatprep.subr.mxu0 0.0
      %2349 = vmatpush1.msra.mxu0 0.0
      %2350 = vmatprep.subr.mxu0 0.0
      %2351 = vmatpush1.msra.mxu0 0.0
      %v2352 = vand.u32 %v1899, 4294901760
      %2353 = vmatprep.subr.mxu0 %v2352
      %v2354 = vand.u32 %v1898, 4294901760
      %2355 = vmatpush1.msra.mxu0 %v2354
      %v2356 = vand.u32 %v1897, 4294901760
      %2357 = vmatprep.subr.mxu0 %v2356
      %v2358 = vand.u32 %v1896, 4294901760
      %2359 = vmatpush1.msra.mxu0 %v2358
      %2360 = vmatprep.subr.mxu0 0.0
      %2361 = vmatpush2.msra.mxu0 0.0
      %2362 = vmatprep.subr.mxu0 0.0
      %2363 = vmatpush2.msra.mxu0 0.0
      %2364 = vmatprep.subr.mxu0 0.0
      %2365 = vmatpush2.msra.mxu0 0.0
      %2366 = vmatprep.subr.mxu0 0.0
      %2367 = vmatpush2.msra.mxu0 0.0
      %2368 = vmatprep.subr.mxu0 0.0
      %2369 = vmatpush2.msra.mxu0 0.0
      %2370 = vmatprep.subr.mxu0 0.0
      %2371 = vmatpush2.msra.mxu0 0.0
      %2372 = vmatprep.subr.mxu0 0.0
      %2373 = vmatpush2.msra.mxu0 0.0
      %2374 = vmatprep.subr.mxu0 0.0
      %2375 = vmatpush2.msra.mxu0 0.0
      %2376 = vmatprep.subr.mxu0 0.0
      %2377 = vmatpush2.msra.mxu0 0.0
      %2378 = vmatprep.subr.mxu0 0.0
      %2379 = vmatpush2.msra.mxu0 0.0
      %2380 = vmatprep.subr.mxu0 0.0
      %2381 = vmatpush2.msra.mxu0 0.0
      %2382 = vmatprep.subr.mxu0 0.0
      %2383 = vmatpush2.msra.mxu0 0.0
      %2384 = vmatprep.subr.mxu0 0.0
      %2385 = vmatpush2.msra.mxu0 0.0
      %2386 = vmatprep.subr.mxu0 0.0
      %2387 = vmatpush2.msra.mxu0 0.0
      %2388 = vmatprep.subr.mxu0 0.0
      %2389 = vmatpush2.msra.mxu0 0.0
      %2390 = vmatprep.subr.mxu0 0.0
      %2391 = vmatpush2.msra.mxu0 0.0
      %2392 = vmatprep.mubr.f32.mxu0 0.0
      %v2393 = vand.u32 %v1907, 4294901760
      %2394 = vmatmul.mubr.f32.gmra.mxu0 %v2393
      %v2395 = vpop.f32.mrf.mxu0
      %v2396 = vadd.f32 %v2320, %v2395
      %v2397 = vpop.f32.mrf.mxu0
      %v2398 = vadd.f32 %v2322, %v2397
      %2399 = vdwg.mxu0
      %v2400 = vrot.slane %v2396, 4
      %v2401 = vadd.f32 %v2396, %v2400
      %v2402 = vrot.slane %v2401, 2
      %v2403 = vadd.f32 %v2401, %v2402
      %v2404 = vrot.slane %v2403, 1
      %v2405 = vadd.f32 %v2403, %v2404
      %v2406 = vsel %vm986, %v2398, 0.0
      %v2407 = vrot.slane %v2406, 4
      %v2408 = vadd.f32 %v2406, %v2407
      %v2409 = vrot.slane %v2408, 2
      %v2410 = vadd.f32 %v2408, %v2409
      %v2411 = vrot.slane %v2410, 1
      %v2412 = vadd.f32 %v2410, %v2411
      %v2413 = vrcp.pop 8.0
      %v2414 = vmul.f32 %v2405, %v2413
      %v2415 = vmul.f32 %v2412, %v2413
      %v2416 = vsub.f32 %v2396, %v2414
      %v2417 = vsub.f32 %v2398, %v2415
      %v2418 = vmul.f32 %v2416, %v2416
      %v2419 = vmul.f32 %v2417, %v2417
      %v2420 = vrot.slane %v2418, 4
      %v2421 = vadd.f32 %v2418, %v2420
      %v2422 = vrot.slane %v2421, 2
      %v2423 = vadd.f32 %v2421, %v2422
      %v2424 = vrot.slane %v2423, 1
      %v2425 = vadd.f32 %v2423, %v2424
      %v2426 = vsel %vm986, %v2419, 0.0
      %v2427 = vrot.slane %v2426, 4
      %v2428 = vadd.f32 %v2426, %v2427
      %v2429 = vrot.slane %v2428, 2
      %v2430 = vadd.f32 %v2428, %v2429
      %v2431 = vrot.slane %v2430, 1
      %v2432 = vadd.f32 %v2430, %v2431
      %v2433 = vmul.f32 %v2425, %v2413
      %v2434 = vmul.f32 %v2432, %v2413
      %v2435 = vadd.f32 %v2433, 1e-05
      %v2436 = vadd.f32 %v2434, 1e-05
      %v2437 = vrsqrt.pop %v2435
      %v2438 = vrsqrt.pop %v2436
      %v2439 = vmul.f32 %v2416, %v2437
      %v2440 = vmul.f32 %v2417, %v2438
      %2441 = vset.pattern.permute.xlu0 6
      %2442 = vperm.xlu0 %2441, %v258
      %v2443 = vpop.permute.xlu0 %2442
      %v2445 = vmul.f32 %v2439, %v2443
      %v2446 = vmul.f32 %v2440, %v2443
      %2447 = vset.pattern.permute.xlu0 7
      %2448 = vperm.xlu0 %2447, %v258
      %v2449 = vpop.permute.xlu0 %2448
      %v2451 = vadd.f32 %v2445, %v2449
      %v2452 = vadd.f32 %v2446, %v2449
      %v2453 = vmul.f32 %v2451, %v2451
      %v2454 = vmul.f32 %v2452, %v2452
      %v2455 = vmul.f32 %v2451, %v2453
      %v2456 = vmul.f32 %v2452, %v2454
      %v2457 = vmul.f32 %v2455, 0.044715
      %v2458 = vmul.f32 %v2456, 0.044715
      %v2459 = vadd.f32 %v2451, %v2457
      %v2460 = vadd.f32 %v2452, %v2458
      %v2461 = vmul.f32 %v2459, 0.7978846
      %v2462 = vmul.f32 %v2460, 0.7978846
      %v2463 = vtanh.pop %v2461
      %v2464 = vtanh.pop %v2462
      %v2465 = vadd.f32 %v2463, 1.0
      %v2466 = vadd.f32 %v2464, 1.0
      %v2467 = vmul.f32 %v2465, 0.5
      %v2468 = vmul.f32 %v2466, 0.5
      %v2469 = vmul.f32 %v2451, %v2467
      %v2470 = vmul.f32 %v2452, %v2468
      %2471 = vset.pattern.permute.xlu0 8
      %2472 = vperm.xlu0 %2471, %v258
      %v2473 = vpop.permute.xlu0 %2472
      %v2475 = vmul.f32 %v2469, %v2473
      %v2476 = vmul.f32 %v2470, %v2473
      %v2477 = vrot.slane %v2475, 4
      %v2478 = vadd.f32 %v2475, %v2477
      %v2479 = vrot.slane %v2478, 2
      %v2480 = vadd.f32 %v2478, %v2479
      %v2481 = vrot.slane %v2480, 1
      %v2482 = vadd.f32 %v2480, %v2481
      %v2483 = vsel %vm986, %v2476, 0.0
      %v2484 = vrot.slane %v2483, 4
      %v2485 = vadd.f32 %v2483, %v2484
      %v2486 = vrot.slane %v2485, 2
      %v2487 = vadd.f32 %v2485, %v2486
      %v2488 = vrot.slane %v2487, 1
      %v2489 = vadd.f32 %v2487, %v2488
      %2490 = vset.pattern.permute.xlu0 9
      %2491 = vperm.xlu0 %2490, %v258
      %v2492 = vpop.permute.xlu0 %2491
      %v2494 = vadd.f32 %v2482, %v2492
      %v2495 = vadd.f32 %v2489, %v2492
      %v2496 = vxor.u32 %v2494, 2147483648
      %v2497 = vxor.u32 %v2495, 2147483648
      %v2498 = vmul.f32 %v2496, 1.442695
      %v2499 = vpow.pop %v2498
      %v2500 = vmul.f32 %v2497, 1.442695
      %v2501 = vpow.pop %v2500
      %v2502 = vadd.f32 %v2499, 1.0
      %v2503 = vadd.f32 %v2501, 1.0
      %v2504 = vrcp.pop %v2502
      %v2505 = vmul.f32 1.0, %v2504
      %v2506 = vrcp.pop %v2503
      %v2507 = vmul.f32 1.0, %v2506
      %v2510 = vcombine.low %v2505, %v2507
      %v2512 = vunpack.c.l.s4 1966171168
      %v2513 = vunpack.c.0.s8 %v2512
      %v2514 = vlaneseq
      %v2515 = vshrl.u32 %v2514, 7
      %v2516 = vsub.s32 %v2513, %v2515
      %v2517 = vrot.slane %v2510, %v2516
      %v2519 = vunpack.c.l.s4 1966171168
      %v2520 = vunpack.c.0.s8 %v2519
      %v2521 = vlaneseq
      %v2522 = vshrl.u32 %v2521, 7
      %v2523 = vsub.s32 %v2520, %v2522
      %v2524 = vrot.slane %v2517, %v2523
      %v2526 = vlaneseq
      %vm2527 = vcmp.ge.s32.totalorder %v2526, 0
      %vm2528 = vcmp.lt.s32.totalorder %v2526, 196
      %vm2529 = vmand %vm2527, %vm2528
      %2530 = vst.msk [vmem:[%s249] sm:$0x3] %vm2529, %v2524
      %p2531 = scmp.lt.s32.totalorder %s17, 1
      %s2532 = scalar_select %p2531, %s17, 1
      %s2533 = smul.addr %s2532, 2
      %s2534 = scalar_lea.vmem %s6, %s2533
      // Predicated region
      $region45: #{importance_scorer.1} parent=43 // pred_check
        %p2535 = pneg %p166
      $region46: #{importance_scorer.1} parent=43 // pred_check_branch
        %2537 = sbr.rel (%p2535) target = $region48
      $region47: #{importance_scorer.1} parent=43 // pred_region
        _
      $region48: #{importance_scorer.1} parent=43 // pred_fallthru
        _
    $region44: #{importance_scorer.1} parent=5 // pred_fallthru
      _
    %p2538 = scmp.le.s32.totalorder 2, %s12
    // Predicated region
    $region49: #{importance_scorer.1} parent=5 // pred_check
      %p2539 = pneg %p2538
    $region50: #{importance_scorer.1} parent=5 // pred_check_branch
      %2541 = sbr.rel (%p2539) target = $region52
    $region51: #{importance_scorer.1} parent=5 // pred_region
      %s2542 = ssub.s32 %s12, 2
      // Predicated region
      $region53: #{importance_scorer.1} parent=51 // pred_check
        %p2543 = pneg %p172
      $region54: #{importance_scorer.1} parent=51 // pred_check_branch
        %2545 = sbr.rel (%p2543) target = $region56
      $region55: #{importance_scorer.1} parent=51 // pred_region
        %p2546 = scmp.lt.s32.totalorder %s18, 1
        %s2547 = scalar_select %p2546, %s18, 1
        %s2548 = smul.addr %s2547, 2
        %s2549 = scalar_lea.vmem %s6, %s2548
      $region56: #{importance_scorer.1} parent=51 // pred_fallthru
        _
    $region52: #{importance_scorer.1} parent=5 // pred_fallthru
      _
  $region6: #{importance_scorer.1} parent=0 // loop_footer
    %s16 = sadd.s32 1, %s12
  $region7: #{importance_scorer.1} parent=0 // loop_footer_branch
    %11 = sbr.rel target = $region3
  $region8: #{importance_scorer.1} parent=0 // loop_exit
    _

</llo_original>
